<compile_context>
chip_gen: v7x
topology: tpu7x:2x2x1
jax: 0.10.0
libtpu: 0.0.40
codegen_flags: <defaults>
</compile_context>

<pallas_src>
import functools
import math

import jax
import jax.numpy as jnp
from jax import lax
from jax.experimental import pallas as pl
from jax.experimental.pallas import tpu as pltpu


# ----------------------------------------------------------------------------
# small helpers
# ----------------------------------------------------------------------------
def _round_up(x, m):
    return ((x + m - 1) // m) * m


def _pick_tile(n, target=256):
    """Largest node-block size out of (target, 256, 128) dividing n, else n.

    target=256 is a good default for v7x (64 MiB VMEM); v6e can use 512,
    v5e prefers 128-256.  For the demo (N=16) this degenerates to the full N.
    """
    for t in (target, 256, 128):
        if t <= n and n % t == 0:
            return t
    return n


# ----------------------------------------------------------------------------
# Kernel 0 (prep, once per forward): degree normalizers from the int8 adjacency.
#   deg[j] = clamp(#nonzeros in row j of adj_r, min=1)   (out-degree, as in the
#   reference which uses degree(row) for BOTH endpoints)
# Outputs per relation:
#   dq  = deg^{-1/4}  (N,1)  dhc = deg^{-1/2} (N,1)  dhr = deg^{-1/2} (1,N)
#   deg_raw = unclamped out-degree (N,1)  (used by the smoothness surrogate)
# The row-layout copy is produced with a 1xN matvec on the MXU to avoid an
# in-kernel transpose.
# ----------------------------------------------------------------------------
def _prep_kernel(adj_ref, dq_ref, dhc_ref, dhr_ref, deg_ref):
    mask = (adj_ref[0] != 0).astype(jnp.float32)                  # (N, N)
    n = mask.shape[0]
    deg_raw = jnp.sum(mask, axis=1, keepdims=True)                # (N, 1)
    deg = jnp.maximum(deg_raw, 1.0)
    dq_ref[0] = lax.rsqrt(jnp.sqrt(deg))                          # deg^{-1/4}
    dhc_ref[0] = lax.rsqrt(deg)                                   # deg^{-1/2}, column
    ones = jnp.ones((1, n), jnp.float32)
    deg_row = lax.dot_general(ones, mask, (((1,), (1,)), ((), ())),
                              preferred_element_type=jnp.float32)  # (1, N) out-degree
    dhr_ref[0] = lax.rsqrt(jnp.maximum(deg_row, 1.0))             # deg^{-1/2}, row
    deg_ref[0] = deg_raw


def adj_prep(adj_i8):
    r, n, _ = adj_i8.shape
    return pl.pallas_call(
        _prep_kernel,
        grid=(r,),
        in_specs=[pl.BlockSpec((1, n, n), lambda i: (i, 0, 0))],
        out_specs=[pl.BlockSpec((1, n, 1), lambda i: (i, 0, 0)),
                   pl.BlockSpec((1, n, 1), lambda i: (i, 0, 0)),
                   pl.BlockSpec((1, 1, n), lambda i: (i, 0, 0)),
                   pl.BlockSpec((1, n, 1), lambda i: (i, 0, 0))],
        out_shape=(jax.ShapeDtypeStruct((r, n, 1), jnp.float32),
                   jax.ShapeDtypeStruct((r, n, 1), jnp.float32),
                   jax.ShapeDtypeStruct((r, 1, n), jnp.float32),
                   jax.ShapeDtypeStruct((r, n, 1), jnp.float32)),
        compiler_params=pltpu.CompilerParams(
            dimension_semantics=("arbitrary",)),
    )(adj_i8)


# ----------------------------------------------------------------------------
# Kernel 1: dense linear layer  y = relu(x @ W^T + b)  (weights contracted with
# dot_general on dim 1 — no in-kernel transpose).
# ----------------------------------------------------------------------------
def _linear_relu_kernel(x_ref, w_ref, b_ref, o_ref):
    y = lax.dot_general(x_ref[...], w_ref[...], (((1,), (1,)), ((), ())),
                        preferred_element_type=jnp.float32) + b_ref[...]
    o_ref[...] = jnp.maximum(y, 0.0)


def linear_relu(x, w, b2d):
    n = x.shape[0]
    out_dim = w.shape[0]
    return pl.pallas_call(
        _linear_relu_kernel,
        out_shape=jax.ShapeDtypeStruct((n, out_dim), jnp.float32),
    )(x, w, b2d)


# ----------------------------------------------------------------------------
# Kernel 2: classifier  logits = x @ W2^T + b2 ; log_softmax(logits, axis=1)
# ----------------------------------------------------------------------------
def _classifier_kernel(x_ref, w_ref, b_ref, logp_ref, logit_ref):
    logits = lax.dot_general(x_ref[...], w_ref[...], (((1,), (1,)), ((), ())),
                             preferred_element_type=jnp.float32) + b_ref[...]
    m = jnp.max(logits, axis=1, keepdims=True)
    z = logits - m
    lse = jnp.log(jnp.sum(jnp.exp(z), axis=1, keepdims=True))
    logp_ref[...] = z - lse
    logit_ref[...] = logits


def classifier(x, w, b2d):
    n = x.shape[0]
    c = w.shape[0]
    return pl.pallas_call(
        _classifier_kernel,
        out_shape=(jax.ShapeDtypeStruct((n, c), jnp.float32),
                   jax.ShapeDtypeStruct((n, c), jnp.float32)),
    )(x, w, b2d)


# ----------------------------------------------------------------------------
# Kernel 3 (light pass): per-relation smoothness scalar s_r.
# TODO(synk): compute_s_r is not defined in the reference source; use the mean
# per-edge feature smoothness (mean_{(j,i) in E} ||hs_j - hs_i||^2 with
# hs = h * deg^{-1/4}) as a deterministic surrogate score.
# Computed WITHOUT materializing the N^2 distance matrix:
#   sum_edges ||hs_j-hs_i||^2 = sum_j outdeg_j*sq_j + sum_i indeg_i*sq_i
#                                - 2 * sum_j hs_j . (mask @ hs)_j
# ----------------------------------------------------------------------------
def _smooth_kernel(adj_ref, h_ref, dq_ref, deg_ref, s_ref):
    mask = (adj_ref[0] != 0).astype(jnp.bfloat16)                 # exact 0/1
    h = h_ref[...]                                                # (N, Hp)
    hs16 = (h * dq_ref[0]).astype(jnp.bfloat16)
    hs = hs16.astype(jnp.float32)
    sq = jnp.sum(hs * hs, axis=1, keepdims=True)                  # (N, 1)
    t = lax.dot_general(mask, hs16, (((1,), (0,)), ((), ())),
                        preferred_element_type=jnp.float32)       # (N, Hp) = mask @ hs
    cross = jnp.sum(hs * t)
    msq = lax.dot_general(mask, sq.astype(jnp.bfloat16), (((1,), (0,)), ((), ())),
                          preferred_element_type=jnp.float32)     # (N, 1) = mask @ sq
    term_in = jnp.sum(msq)
    deg = deg_ref[0]                                              # (N, 1) raw out-degree
    term_out = jnp.sum(deg * sq)
    n_edges = jnp.maximum(jnp.sum(deg), 1.0)
    s_val = jnp.maximum(term_out + term_in - 2.0 * cross, 0.0) / n_edges
    s_ref[...] = jnp.reshape(s_val, (1, 1, 1))


def relation_smoothness(adj_i8, h, dq, deg_raw):
    r, n, _ = adj_i8.shape
    hp = h.shape[1]
    # TODO(synk): for very large N this pass should be tiled over source blocks
    # like the aggregation pass; kept whole-relation here for clarity.
    return pl.pallas_call(
        _smooth_kernel,
        grid=(r,),
        in_specs=[pl.BlockSpec((1, n, n), lambda i: (i, 0, 0)),
                  pl.BlockSpec((n, hp), lambda i: (0, 0)),
                  pl.BlockSpec((1, n, 1), lambda i: (i, 0, 0)),
                  pl.BlockSpec((1, n, 1), lambda i: (i, 0, 0))],
        out_specs=pl.BlockSpec((1, 1, 1), lambda i: (i, 0, 0)),
        out_shape=jax.ShapeDtypeStruct((r, 1, 1), jnp.float32),
        compiler_params=pltpu.CompilerParams(
            dimension_semantics=("arbitrary",)),
    )(adj_i8, h, dq, deg_raw)


# ----------------------------------------------------------------------------
# Kernel 4 (the hot path): fused per-layer aggregation + residual.
# Grid (target-blocks i, relations r, source-blocks j); for each (i, r, j):
#   dist[a,b] = || hs_j[a] - hs_i[b] ||^2      (bf16 gram on the MXU, f32 acc)
#   g         = tanh((dist + 1e-4)^{-gamma/2})  (rsqrt when gamma == 1)
#   M[a,b]    = 1{adj!=0} * g * deg_j^{-1/2} * deg_i^{-1/2}
#   acc      += u[r] * M^T h_j                  (dot_general, contract source axis)
# and on the last (r, j):  out_i = alpha*raw_i + (1-alpha)*acc.
# u arrives via scalar prefetch (SMEM); the (R,N,H) intermediate never hits HBM.
# ----------------------------------------------------------------------------
def _agg_kernel(u_ref, adj_ref, hj_ref, hi_ref, dqj_ref, dqi_ref, dhj_ref,
                dhi_ref, raw_ref, o_ref, acc_ref, *, gamma, alpha):
    r = pl.program_id(1)
    j = pl.program_id(2)

    @pl.when(jnp.logical_and(r == 0, j == 0))
    def _init():
        acc_ref[...] = jnp.zeros_like(acc_ref)

    mask = adj_ref[0]                                             # (TJ, TI) int8
    hj = hj_ref[...]                                              # (TJ, Hp) message payload
    hi = hi_ref[...]                                              # (TI, Hp)
    hs_j16 = (hj * dqj_ref[0]).astype(jnp.bfloat16)
    hs_i16 = (hi * dqi_ref[0]).astype(jnp.bfloat16)
    hs_j = hs_j16.astype(jnp.float32)
    hs_i = hs_i16.astype(jnp.float32)
    sq_j = jnp.sum(hs_j * hs_j, axis=1, keepdims=True)            # (TJ, 1)
    sq_i = jnp.sum(hs_i * hs_i, axis=1, keepdims=True)            # (TI, 1)
    gram = lax.dot_general(hs_j16, hs_i16, (((1,), (1,)), ((), ())),
                           preferred_element_type=jnp.float32)    # (TJ, TI)
    dist = jnp.maximum(sq_j + sq_i.T - 2.0 * gram, 0.0)           # f32 subtraction + clamp
    eps = dist + 1e-4
    if gamma == 1.0:
        inv = lax.rsqrt(eps)                    # single EUP op instead of exp(log(.)*y)
    elif gamma == 2.0:
        inv = pl.reciprocal(eps)
    else:
        inv = jnp.exp((-0.5 * gamma) * jnp.log(eps))
    g = jnp.tanh(inv)
    norm = g * dhj_ref[0] * dhi_ref[0]                            # (TJ,TI)*(TJ,1)*(1,TI)
    m = jnp.where(mask != 0, norm, 0.0).astype(jnp.bfloat16)      # masked message weights
    contrib = lax.dot_general(m, hj.astype(jnp.bfloat16), (((0,), (0,)), ((), ())),
                              preferred_element_type=jnp.float32)  # (TI, Hp) = M^T h_j
    acc_ref[...] += u_ref[r] * contrib

    last = jnp.logical_and(r == pl.num_programs(1) - 1,
                           j == pl.num_programs(2) - 1)

    @pl.when(last)
    def _finalize():
        o_ref[...] = alpha * raw_ref[...] + (1.0 - alpha) * acc_ref[...]


def cc_aggregate(adj_i8, h, raw, dq, dhc, dhr, u, *, gamma, alpha, tile):
    num_r, n, _ = adj_i8.shape
    hp = h.shape[1]
    ti = tj = tile
    grid = (n // ti, num_r, n // tj)
    kernel = functools.partial(_agg_kernel, gamma=gamma, alpha=alpha)
    return pl.pallas_call(
        kernel,
        grid_spec=pltpu.PrefetchScalarGridSpec(
            num_scalar_prefetch=1,
            grid=grid,
            in_specs=[
                pl.BlockSpec((1, tj, ti), lambda i, r, j, u_sm: (r, j, i)),  # adj (int8)
                pl.BlockSpec((tj, hp),    lambda i, r, j, u_sm: (j, 0)),     # h  (source)
                pl.BlockSpec((ti, hp),    lambda i, r, j, u_sm: (i, 0)),     # h  (target)
                pl.BlockSpec((1, tj, 1),  lambda i, r, j, u_sm: (r, j, 0)),  # deg^-1/4 src
                pl.BlockSpec((1, ti, 1),  lambda i, r, j, u_sm: (r, i, 0)),  # deg^-1/4 tgt
                pl.BlockSpec((1, tj, 1),  lambda i, r, j, u_sm: (r, j, 0)),  # deg^-1/2 src
                pl.BlockSpec((1, 1, ti),  lambda i, r, j, u_sm: (r, 0, i)),  # deg^-1/2 tgt
                pl.BlockSpec((ti, hp),    lambda i, r, j, u_sm: (i, 0)),     # raw (residual)
            ],
            out_specs=pl.BlockSpec((ti, hp), lambda i, r, j, u_sm: (i, 0)),
            scratch_shapes=[pltpu.VMEM((ti, hp), jnp.float32)],
        ),
        out_shape=jax.ShapeDtypeStruct((n, hp), jnp.float32),
        compiler_params=pltpu.CompilerParams(
            dimension_semantics=("parallel", "arbitrary", "arbitrary")),
    )(u, adj_i8, h, h, dq, dq, dhc, dhr, raw)


# ----------------------------------------------------------------------------
# comp_coefficient: tiny (R x 1) mirror-descent iteration with a data-dependent
# stopping condition.  Stays in plain JAX (lax.while_loop) — scalar-scale work.
# ----------------------------------------------------------------------------
def comp_coefficient(s_r, num_relations, lamda1, lamda2, threshold_c):
    c = 2.0 * lamda2 / lamda1
    l1tr = jnp.sum(jnp.abs(s_r), axis=0)                 # (1,)  == torch.norm(p=1, dim=0)
    fi = l1tr + c                                        # (1,)
    u0 = jnp.full((num_relations, 1), 1.0 / num_relations, jnp.float32)
    log_r = math.log(num_relations)

    def cond_fn(carry):
        _, _, cond = carry
        return cond >= threshold_c

    def body_fn(carry):
        u, t, _ = carry
        t_t = jnp.sqrt(2.0 * log_r / (t * fi * fi))      # (1,)
        f_de = c * u + s_r                               # (R, 1)
        u_ta = u * jnp.exp(-t_t * f_de)
        u_new = u_ta / jnp.sum(u_ta)
        cond = jnp.sqrt(jnp.sum(jnp.square(u - u_new)))
        return u_new, t + 1.0, cond

    u, _, _ = lax.while_loop(
        cond_fn, body_fn, (u0, jnp.float32(1.0), jnp.float32(jnp.inf)))
    return u


# ----------------------------------------------------------------------------
# Full CGCN forward (inference: dropouts are identity).
# Returns (log_softmax(logits, axis=1), logits) like the PyTorch module.
# ----------------------------------------------------------------------------
def cgcn_forward(x, params, adj, *, alpha, layer_num, gamma,
                 lamda1, lamda2, threshold_c, tile_target=256):
    num_relations, n, _ = adj.shape
    h_dim = params["w1"].shape[0]
    hp = _round_up(h_dim, 128)                 # lane-dense hidden width

    # Zero-pad the hidden dimension once; padded features stay exactly zero
    # through relu / message passing / residual, and W2 ignores them.
    w1p = jnp.pad(params["w1"], ((0, hp - h_dim), (0, 0)))
    b1p = jnp.pad(params["b1"], (0, hp - h_dim)).reshape(1, -1)
    w2p = jnp.pad(params["w2"], ((0, 0), (0, hp - h_dim)))
    b2p = params["b2"].reshape(1, -1)

    # Constant graph structure, prepared once per forward (not per layer).
    adj_i8 = (adj != 0).astype(jnp.int8)
    dq, dhc, dhr, deg_raw = adj_prep(adj_i8)
    tile = _pick_tile(n, tile_target)

    h = linear_relu(x, w1p, b1p)               # (N, Hp)
    raw = h
    for _ in range(layer_num):
        s = relation_smoothness(adj_i8, h, dq, deg_raw)            # (R, 1, 1)
        u = comp_coefficient(s[:, 0, :], num_relations,
                             lamda1, lamda2, threshold_c)          # (R, 1)
        h = cc_aggregate(adj_i8, h, raw, dq, dhc, dhr, u[:, 0],
                         gamma=gamma, alpha=alpha, tile=tile)      # (N, Hp)
    log_probs, logits = classifier(h, w2p, b2p)
    return log_probs, logits


# ----------------------------------------------------------------------------
# Deterministic parameter init (matches shapes from the PyTorch __init__).
# ----------------------------------------------------------------------------
def xavier_normal(key, shape, gain):
    fan_out, fan_in = shape
    std = gain * math.sqrt(2.0 / (fan_in + fan_out))
    return std * jax.random.normal(key, shape, jnp.float32)


if __name__ == "__main__":
    # small shapes consistent with the module's forward
    N, F, H, C, R = 16, 8, 32, 4, 3
    alpha = 0.1
    layer_num = 2
    gamma = 1.0
    lamda2 = 0.01
    lamda1 = 1.0 / alpha - 1.0
    threshold_c = 1e-4

    key = jax.random.PRNGKey(0)
    keys = jax.random.split(key, 6)

    x = jax.random.normal(keys[0], (N, F), jnp.float32)
    adj = (jax.random.uniform(keys[1], (R, N, N)) < 0.3).astype(jnp.float32)

    w1 = xavier_normal(keys[2], (H, F), 1.414)
    b1 = jax.random.uniform(keys[3], (H,), jnp.float32,
                            minval=-1.0 / math.sqrt(F), maxval=1.0 / math.sqrt(F))
    w2 = xavier_normal(keys[4], (C, H), 1.414)
    b2 = jax.random.uniform(keys[5], (C,), jnp.float32,
                            minval=-1.0 / math.sqrt(H), maxval=1.0 / math.sqrt(H))
    params = dict(w1=w1, b1=b1, w2=w2, b2=b2)

    fwd = jax.jit(functools.partial(
        cgcn_forward, alpha=alpha, layer_num=layer_num, gamma=gamma,
        lamda1=lamda1, lamda2=lamda2, threshold_c=threshold_c))

    log_probs, logits = fwd(x, params, adj)
    jax.block_until_ready((log_probs, logits))

    assert log_probs.shape == (N, C) and logits.shape == (N, C)
    assert bool(jnp.isfinite(log_probs).all()) and bool(jnp.isfinite(logits).all())
    print("KERNEL_OK")
</pallas_src>

<mosaic_0001>
module attributes {stable_mosaic.version = 11 : i64} {
  func.func @_linear_relu_kernel(%arg0: memref<16x8xf32, #tpu.memory_space<vmem>>, %arg1: memref<128x8xf32, #tpu.memory_space<vmem>>, %arg2: memref<1x128xf32, #tpu.memory_space<vmem>>, %arg3: memref<16x128xf32, #tpu.memory_space<vmem>>) attributes {dimension_semantics = [], scalar_prefetch = 0 : i64, scratch_operands = 0 : i64, tpu.core_type = #tpu.core_type<tc>} {
    %c0 = arith.constant 0 : index
    %c0_0 = arith.constant 0 : index
    %0 = vector.load %arg0[%c0, %c0_0] : memref<16x8xf32, #tpu.memory_space<vmem>>, vector<16x8xf32>
    %c0_1 = arith.constant 0 : index
    %c0_2 = arith.constant 0 : index
    %1 = vector.load %arg1[%c0_1, %c0_2] : memref<128x8xf32, #tpu.memory_space<vmem>>, vector<128x8xf32>
    %cst = arith.constant dense<0.000000e+00> : vector<16x128xf32>
    %2 = tpu.matmul %0, %1, %cst {dimension_numbers = #tpu.dot_dimension_numbers<[1], [1], [0], [0], [0, 0, 1, 0], [], []>} : vector<16x8xf32>, vector<128x8xf32>, vector<16x128xf32> -> vector<16x128xf32>
    %c0_3 = arith.constant 0 : index
    %c0_4 = arith.constant 0 : index
    %3 = vector.load %arg2[%c0_3, %c0_4] : memref<1x128xf32, #tpu.memory_space<vmem>>, vector<1x128xf32>
    %4 = vector.broadcast %3 : vector<1x128xf32> to vector<16x128xf32>
    %5 = arith.addf %2, %4 : vector<16x128xf32>
    %cst_5 = arith.constant 0.000000e+00 : f32
    %6 = vector.broadcast %cst_5 : f32 to vector<16x128xf32>
    %7 = arith.maximumf %5, %6 : vector<16x128xf32>
    %c0_6 = arith.constant 0 : index
    %c0_7 = arith.constant 0 : index
    %8 = vector.load %arg3[%c0_6, %c0_7] : memref<16x128xf32, #tpu.memory_space<vmem>>, vector<16x128xf32>
    tpu.vector_store %arg3[%c0_6, %c0_7], %7 {strides = array<i32>} : memref<16x128xf32, #tpu.memory_space<vmem>>, vector<16x128xf32>,
    return
  }
}

module attributes {stable_mosaic.version = 11 : i64} {
  func.func @_prep_kernel(%arg0: i32, %arg1: memref<1x16x16xi8, #tpu.memory_space<vmem>>, %arg2: memref<1x16x1xf32, #tpu.memory_space<vmem>>, %arg3: memref<1x16x1xf32, #tpu.memory_space<vmem>>, %arg4: memref<1x1x16xf32, #tpu.memory_space<vmem>>, %arg5: memref<1x16x1xf32, #tpu.memory_space<vmem>>) attributes {dimension_semantics = [#tpu.dimension_semantics<arbitrary>], iteration_bounds = array<i64: 3>, scalar_prefetch = 0 : i64, scratch_operands = 0 : i64, tpu.core_type = #tpu.core_type<tc>, window_params = [{transform_indices = @transform_0, window_bounds = array<i64: 1, 16, 16>}, {transform_indices = @transform_1, window_bounds = array<i64: 1, 16, 1>}, {transform_indices = @transform_2, window_bounds = array<i64: 1, 16, 1>}, {transform_indices = @transform_3, window_bounds = array<i64: 1, 1, 16>}, {transform_indices = @transform_4, window_bounds = array<i64: 1, 16, 1>}]} {
    %c0 = arith.constant 0 : index
    %c0_0 = arith.constant 0 : index
    %c0_1 = arith.constant 0 : index
    %0 = vector.load %arg1[%c0, %c0_0, %c0_1] : memref<1x16x16xi8, #tpu.memory_space<vmem>>, vector<1x16x16xi8>
    %1 = vector.shape_cast %0 : vector<1x16x16xi8> to vector<16x16xi8>
    %c0_i8 = arith.constant 0 : i8
    %2 = vector.broadcast %c0_i8 : i8 to vector<16x16xi8>
    %3 = arith.cmpi ne, %1, %2 : vector<16x16xi8>
    %4 = arith.extui %3 : vector<16x16xi1> to vector<16x16xi32>
    %5 = arith.sitofp %4 : vector<16x16xi32> to vector<16x16xf32>
    %cst = arith.constant dense<0.000000e+00> : vector<16xf32>
    %6 = vector.multi_reduction <add>, %5, %cst [1] : vector<16x16xf32> to vector<16xf32>
    %7 = vector.shape_cast %6 : vector<16xf32> to vector<16x1xf32>
    %cst_2 = arith.constant 1.000000e+00 : f32
    %8 = vector.broadcast %cst_2 : f32 to vector<16x1xf32>
    %9 = arith.maximumf %7, %8 : vector<16x1xf32>
    %10 = math.sqrt %9 : vector<16x1xf32>
    %11 = math.rsqrt %10 : vector<16x1xf32>
    %c0_3 = arith.constant 0 : index
    %c0_4 = arith.constant 0 : index
    %c0_5 = arith.constant 0 : index
    %12 = vector.load %arg2[%c0_3, %c0_4, %c0_5] : memref<1x16x1xf32, #tpu.memory_space<vmem>>, vector<1x16x1xf32>
    %13 = vector.shape_cast %12 : vector<1x16x1xf32> to vector<16x1xf32>
    %14 = vector.shape_cast %11 : vector<16x1xf32> to vector<1x16x1xf32>
    tpu.vector_store %arg2[%c0_3, %c0_4, %c0_5], %14 {strides = array<i32>} : memref<1x16x1xf32, #tpu.memory_space<vmem>>, vector<1x16x1xf32>,
    %15 = math.rsqrt %9 : vector<16x1xf32>
    %c0_6 = arith.constant 0 : index
    %c0_7 = arith.constant 0 : index
    %c0_8 = arith.constant 0 : index
    %16 = vector.load %arg3[%c0_6, %c0_7, %c0_8] : memref<1x16x1xf32, #tpu.memory_space<vmem>>, vector<1x16x1xf32>
    %17 = vector.shape_cast %16 : vector<1x16x1xf32> to vector<16x1xf32>
    %18 = vector.shape_cast %15 : vector<16x1xf32> to vector<1x16x1xf32>
    tpu.vector_store %arg3[%c0_6, %c0_7, %c0_8], %18 {strides = array<i32>} : memref<1x16x1xf32, #tpu.memory_space<vmem>>, vector<1x16x1xf32>,
    %cst_9 = arith.constant 1.000000e+00 : f32
    %19 = vector.broadcast %cst_9 : f32 to vector<1x16xf32>
    %cst_10 = arith.constant dense<0.000000e+00> : vector<1x16xf32>
    %20 = tpu.matmul %19, %5, %cst_10 {dimension_numbers = #tpu.dot_dimension_numbers<[1], [1], [0], [0], [0, 0, 1, 0], [], []>} : vector<1x16xf32>, vector<16x16xf32>, vector<1x16xf32> -> vector<1x16xf32>
    %cst_11 = arith.constant 1.000000e+00 : f32
    %21 = vector.broadcast %cst_11 : f32 to vector<1x16xf32>
    %22 = arith.maximumf %20, %21 : vector<1x16xf32>
    %23 = math.rsqrt %22 : vector<1x16xf32>
    %c0_12 = arith.constant 0 : index
    %c0_13 = arith.constant 0 : index
    %c0_14 = arith.constant 0 : index
    %24 = vector.load %arg4[%c0_12, %c0_13, %c0_14] : memref<1x1x16xf32, #tpu.memory_space<vmem>>, vector<1x1x16xf32>
    %25 = vector.shape_cast %24 : vector<1x1x16xf32> to vector<1x16xf32>
    %26 = vector.shape_cast %23 : vector<1x16xf32> to vector<1x1x16xf32>
    tpu.vector_store %arg4[%c0_12, %c0_13, %c0_14], %26 {strides = array<i32>} : memref<1x1x16xf32, #tpu.memory_space<vmem>>, vector<1x1x16xf32>,
    %c0_15 = arith.constant 0 : index
    %c0_16 = arith.constant 0 : index
    %c0_17 = arith.constant 0 : index
    %27 = vector.load %arg5[%c0_15, %c0_16, %c0_17] : memref<1x16x1xf32, #tpu.memory_space<vmem>>, vector<1x16x1xf32>
    %28 = vector.shape_cast %27 : vector<1x16x1xf32> to vector<16x1xf32>
    %29 = vector.shape_cast %7 : vector<16x1xf32> to vector<1x16x1xf32>
    tpu.vector_store %arg5[%c0_15, %c0_16, %c0_17], %29 {strides = array<i32>} : memref<1x16x1xf32, #tpu.memory_space<vmem>>, vector<1x16x1xf32>,
    return
  }
  func.func @transform_0(%arg0: i32) -> (i32, i32, i32) {
    %c0_i32 = arith.constant 0 : i32
    %c0_i32_0 = arith.constant 0 : i32
    %c0_i32_1 = arith.constant 0 : i32
    return %arg0, %c0_i32, %c0_i32_0 : i32, i32, i32
  }
  func.func @transform_1(%arg0: i32) -> (i32, i32, i32) {
    %c0_i32 = arith.constant 0 : i32
    %c0_i32_0 = arith.constant 0 : i32
    %c0_i32_1 = arith.constant 0 : i32
    return %arg0, %c0_i32, %c0_i32_0 : i32, i32, i32
  }
  func.func @transform_2(%arg0: i32) -> (i32, i32, i32) {
    %c0_i32 = arith.constant 0 : i32
    %c0_i32_0 = arith.constant 0 : i32
    %c0_i32_1 = arith.constant 0 : i32
    return %arg0, %c0_i32, %c0_i32_0 : i32, i32, i32
  }
  func.func @transform_3(%arg0: i32) -> (i32, i32, i32) {
    %c0_i32 = arith.constant 0 : i32
    %c0_i32_0 = arith.constant 0 : i32
    %c0_i32_1 = arith.constant 0 : i32
    return %arg0, %c0_i32, %c0_i32_0 : i32, i32, i32
  }
  func.func @transform_4(%arg0: i32) -> (i32, i32, i32) {
    %c0_i32 = arith.constant 0 : i32
    %c0_i32_0 = arith.constant 0 : i32
    %c0_i32_1 = arith.constant 0 : i32
    return %arg0, %c0_i32, %c0_i32_0 : i32, i32, i32
  }
}

module attributes {stable_mosaic.version = 11 : i64} {
  func.func @_smooth_kernel(%arg0: i32, %arg1: memref<1x16x16xi8, #tpu.memory_space<vmem>>, %arg2: memref<16x128xf32, #tpu.memory_space<vmem>>, %arg3: memref<1x16x1xf32, #tpu.memory_space<vmem>>, %arg4: memref<1x16x1xf32, #tpu.memory_space<vmem>>, %arg5: memref<1x1x1xf32, #tpu.memory_space<vmem>>) attributes {dimension_semantics = [#tpu.dimension_semantics<arbitrary>], iteration_bounds = array<i64: 3>, scalar_prefetch = 0 : i64, scratch_operands = 0 : i64, tpu.core_type = #tpu.core_type<tc>, window_params = [{transform_indices = @transform_0, window_bounds = array<i64: 1, 16, 16>}, {pipeline_mode = #tpu.pipeline_mode<synchronous>, transform_indices = @transform_1, window_bounds = array<i64: 16, 128>}, {transform_indices = @transform_2, window_bounds = array<i64: 1, 16, 1>}, {transform_indices = @transform_3, window_bounds = array<i64: 1, 16, 1>}, {transform_indices = @transform_4, window_bounds = array<i64: 1, 1, 1>}]} {
    %c0 = arith.constant 0 : index
    %c0_0 = arith.constant 0 : index
    %c0_1 = arith.constant 0 : index
    %0 = vector.load %arg1[%c0, %c0_0, %c0_1] : memref<1x16x16xi8, #tpu.memory_space<vmem>>, vector<1x16x16xi8>
    %1 = vector.shape_cast %0 : vector<1x16x16xi8> to vector<16x16xi8>
    %c0_i8 = arith.constant 0 : i8
    %2 = vector.broadcast %c0_i8 : i8 to vector<16x16xi8>
    %3 = arith.cmpi ne, %1, %2 : vector<16x16xi8>
    %4 = arith.extui %3 : vector<16x16xi1> to vector<16x16xi32>
    %5 = arith.sitofp %4 : vector<16x16xi32> to vector<16x16xf32>
    %6 = arith.truncf %5 : vector<16x16xf32> to vector<16x16xbf16>
    %c0_2 = arith.constant 0 : index
    %c0_3 = arith.constant 0 : index
    %7 = vector.load %arg2[%c0_2, %c0_3] : memref<16x128xf32, #tpu.memory_space<vmem>>, vector<16x128xf32>
    %c0_4 = arith.constant 0 : index
    %c0_5 = arith.constant 0 : index
    %c0_6 = arith.constant 0 : index
    %8 = vector.load %arg3[%c0_4, %c0_5, %c0_6] : memref<1x16x1xf32, #tpu.memory_space<vmem>>, vector<1x16x1xf32>
    %9 = vector.shape_cast %8 : vector<1x16x1xf32> to vector<16x1xf32>
    %10 = vector.broadcast %9 : vector<16x1xf32> to vector<16x128xf32>
    %11 = arith.mulf %7, %10 : vector<16x128xf32>
    %12 = arith.truncf %11 : vector<16x128xf32> to vector<16x128xbf16>
    %13 = arith.extf %12 : vector<16x128xbf16> to vector<16x128xf32>
    %14 = arith.mulf %13, %13 : vector<16x128xf32>
    %cst = arith.constant dense<0.000000e+00> : vector<16xf32>
    %15 = vector.multi_reduction <add>, %14, %cst [1] : vector<16x128xf32> to vector<16xf32>
    %16 = vector.shape_cast %15 : vector<16xf32> to vector<16x1xf32>
    %cst_7 = arith.constant dense<0.000000e+00> : vector<16x128xf32>
    %17 = tpu.matmul %6, %12, %cst_7 {dimension_numbers = #tpu.dot_dimension_numbers<[1], [0], [0], [1], [0, 0, 1, 1], [], []>} : vector<16x16xbf16>, vector<16x128xbf16>, vector<16x128xf32> -> vector<16x128xf32>
    %18 = arith.mulf %13, %17 : vector<16x128xf32>
    %19 = vector.shape_cast %18 : vector<16x128xf32> to vector<1x16x128xf32>
    %cst_8 = arith.constant dense<0.000000e+00> : vector<1xf32>
    %20 = vector.multi_reduction <add>, %19, %cst_8 [1, 2] : vector<1x16x128xf32> to vector<1xf32>
    %21 = vector.shape_cast %20 : vector<1xf32> to vector<1x1x1xf32>
    %22 = vector.extract %21[0, 0, 0] : f32 from vector<1x1x1xf32>
    %23 = arith.truncf %16 : vector<16x1xf32> to vector<16x1xbf16>
    %cst_9 = arith.constant dense<0.000000e+00> : vector<16x1xf32>
    %24 = tpu.matmul %6, %23, %cst_9 {dimension_numbers = #tpu.dot_dimension_numbers<[1], [0], [0], [1], [0, 0, 1, 1], [], []>} : vector<16x16xbf16>, vector<16x1xbf16>, vector<16x1xf32> -> vector<16x1xf32>
    %25 = vector.shape_cast %24 : vector<16x1xf32> to vector<1x16x1xf32>
    %cst_10 = arith.constant dense<0.000000e+00> : vector<1xf32>
    %26 = vector.multi_reduction <add>, %25, %cst_10 [1, 2] : vector<1x16x1xf32> to vector<1xf32>
    %27 = vector.shape_cast %26 : vector<1xf32> to vector<1x1x1xf32>
    %28 = vector.extract %27[0, 0, 0] : f32 from vector<1x1x1xf32>
    %c0_11 = arith.constant 0 : index
    %c0_12 = arith.constant 0 : index
    %c0_13 = arith.constant 0 : index
    %29 = vector.load %arg4[%c0_11, %c0_12, %c0_13] : memref<1x16x1xf32, #tpu.memory_space<vmem>>, vector<1x16x1xf32>
    %30 = vector.shape_cast %29 : vector<1x16x1xf32> to vector<16x1xf32>
    %31 = arith.mulf %30, %16 : vector<16x1xf32>
    %32 = vector.shape_cast %31 : vector<16x1xf32> to vector<1x16x1xf32>
    %cst_14 = arith.constant dense<0.000000e+00> : vector<1xf32>
    %33 = vector.multi_reduction <add>, %32, %cst_14 [1, 2] : vector<1x16x1xf32> to vector<1xf32>
    %34 = vector.shape_cast %33 : vector<1xf32> to vector<1x1x1xf32>
    %35 = vector.extract %34[0, 0, 0] : f32 from vector<1x1x1xf32>
    %36 = vector.shape_cast %30 : vector<16x1xf32> to vector<1x16x1xf32>
    %cst_15 = arith.constant dense<0.000000e+00> : vector<1xf32>
    %37 = vector.multi_reduction <add>, %36, %cst_15 [1, 2] : vector<1x16x1xf32> to vector<1xf32>
    %38 = vector.shape_cast %37 : vector<1xf32> to vector<1x1x1xf32>
    %39 = vector.extract %38[0, 0, 0] : f32 from vector<1x1x1xf32>
    %cst_16 = arith.constant 1.000000e+00 : f32
    %40 = arith.maximumf %39, %cst_16 : f32
    %41 = arith.addf %35, %28 : f32
    %cst_17 = arith.constant 2.000000e+00 : f32
    %42 = arith.mulf %cst_17, %22 : f32
    %43 = arith.subf %41, %42 : f32
    %cst_18 = arith.constant 0.000000e+00 : f32
    %44 = arith.maximumf %43, %cst_18 : f32
    %45 = arith.divf %44, %40 : f32
    %46 = vector.broadcast %45 : f32 to vector<1x1x1xf32>
    %c0_19 = arith.constant 0 : index
    %c0_20 = arith.constant 0 : index
    %c0_21 = arith.constant 0 : index
    %47 = vector.load %arg5[%c0_19, %c0_20, %c0_21] : memref<1x1x1xf32, #tpu.memory_space<vmem>>, vector<1x1x1xf32>
    tpu.vector_store %arg5[%c0_19, %c0_20, %c0_21], %46 {strides = array<i32>} : memref<1x1x1xf32, #tpu.memory_space<vmem>>, vector<1x1x1xf32>,
    return
  }
  func.func @transform_0(%arg0: i32) -> (i32, i32, i32) {
    %c0_i32 = arith.constant 0 : i32
    %c0_i32_0 = arith.constant 0 : i32
    %c0_i32_1 = arith.constant 0 : i32
    return %arg0, %c0_i32, %c0_i32_0 : i32, i32, i32
  }
  func.func @transform_1(%arg0: i32) -> (i32, i32) {
    %c0_i32 = arith.constant 0 : i32
    %c0_i32_0 = arith.constant 0 : i32
    %c0_i32_1 = arith.constant 0 : i32
    return %c0_i32, %c0_i32_0 : i32, i32
  }
  func.func @transform_2(%arg0: i32) -> (i32, i32, i32) {
    %c0_i32 = arith.constant 0 : i32
    %c0_i32_0 = arith.constant 0 : i32
    %c0_i32_1 = arith.constant 0 : i32
    return %arg0, %c0_i32, %c0_i32_0 : i32, i32, i32
  }
  func.func @transform_3(%arg0: i32) -> (i32, i32, i32) {
    %c0_i32 = arith.constant 0 : i32
    %c0_i32_0 = arith.constant 0 : i32
    %c0_i32_1 = arith.constant 0 : i32
    return %arg0, %c0_i32, %c0_i32_0 : i32, i32, i32
  }
  func.func @transform_4(%arg0: i32) -> (i32, i32, i32) {
    %c0_i32 = arith.constant 0 : i32
    %c0_i32_0 = arith.constant 0 : i32
    %c0_i32_1 = arith.constant 0 : i32
    return %arg0, %c0_i32, %c0_i32_0 : i32, i32, i32
  }
}

module attributes {stable_mosaic.version = 11 : i64} {
  func.func @_agg_kernel(%arg0: i32, %arg1: i32, %arg2: i32, %arg3: memref<3xf32, #tpu.memory_space<smem>>, %arg4: memref<1x16x16xi8, #tpu.memory_space<vmem>>, %arg5: memref<16x128xf32, #tpu.memory_space<vmem>>, %arg6: memref<16x128xf32, #tpu.memory_space<vmem>>, %arg7: memref<1x16x1xf32, #tpu.memory_space<vmem>>, %arg8: memref<1x16x1xf32, #tpu.memory_space<vmem>>, %arg9: memref<1x16x1xf32, #tpu.memory_space<vmem>>, %arg10: memref<1x1x16xf32, #tpu.memory_space<vmem>>, %arg11: memref<16x128xf32, #tpu.memory_space<vmem>>, %arg12: memref<16x128xf32, #tpu.memory_space<vmem>>, %arg13: memref<16x128xf32, #tpu.memory_space<vmem>>) attributes {dimension_semantics = [#tpu.dimension_semantics<parallel>, #tpu.dimension_semantics<arbitrary>, #tpu.dimension_semantics<arbitrary>], iteration_bounds = array<i64: 1, 3, 1>, scalar_prefetch = 1 : i64, scratch_operands = 1 : i64, tpu.core_type = #tpu.core_type<tc>, window_params = [{transform_indices = @transform_0, window_bounds = array<i64: 1, 16, 16>}, {transform_indices = @transform_1, window_bounds = array<i64: 16, 128>}, {transform_indices = @transform_2, window_bounds = array<i64: 16, 128>}, {transform_indices = @transform_3, window_bounds = array<i64: 1, 16, 1>}, {transform_indices = @transform_4, window_bounds = array<i64: 1, 16, 1>}, {transform_indices = @transform_5, window_bounds = array<i64: 1, 16, 1>}, {transform_indices = @transform_6, window_bounds = array<i64: 1, 1, 16>}, {transform_indices = @transform_7, window_bounds = array<i64: 16, 128>}, {transform_indices = @transform_8, window_bounds = array<i64: 16, 128>}]} {
    %c0_i32 = arith.constant 0 : i32
    %0 = arith.cmpi eq, %arg1, %c0_i32 : i32
    %c0_i32_0 = arith.constant 0 : i32
    %1 = arith.cmpi eq, %arg2, %c0_i32_0 : i32
    %2 = arith.andi %0, %1 : i1
    %3 = arith.extui %2 : i1 to i32
    %c0_i32_1 = arith.constant 0 : i32
    %4 = arith.cmpi ne, %3, %c0_i32_1 : i32
    scf.if %4 {
      %cst_33 = arith.constant 0.000000e+00 : f32
      %68 = vector.broadcast %cst_33 : f32 to vector<16x128xf32>
      %c0_34 = arith.constant 0 : index
      %c0_35 = arith.constant 0 : index
      %69 = vector.load %arg13[%c0_34, %c0_35] : memref<16x128xf32, #tpu.memory_space<vmem>>, vector<16x128xf32>
      tpu.vector_store %arg13[%c0_34, %c0_35], %68 {strides = array<i32>} : memref<16x128xf32, #tpu.memory_space<vmem>>, vector<16x128xf32>,
    } else {
    }
    %c0 = arith.constant 0 : index
    %c0_2 = arith.constant 0 : index
    %c0_3 = arith.constant 0 : index
    %5 = vector.load %arg4[%c0, %c0_2, %c0_3] : memref<1x16x16xi8, #tpu.memory_space<vmem>>, vector<1x16x16xi8>
    %6 = vector.shape_cast %5 : vector<1x16x16xi8> to vector<16x16xi8>
    %c0_4 = arith.constant 0 : index
    %c0_5 = arith.constant 0 : index
    %7 = vector.load %arg5[%c0_4, %c0_5] : memref<16x128xf32, #tpu.memory_space<vmem>>, vector<16x128xf32>
    %c0_6 = arith.constant 0 : index
    %c0_7 = arith.constant 0 : index
    %8 = vector.load %arg6[%c0_6, %c0_7] : memref<16x128xf32, #tpu.memory_space<vmem>>, vector<16x128xf32>
    %c0_8 = arith.constant 0 : index
    %c0_9 = arith.constant 0 : index
    %c0_10 = arith.constant 0 : index
    %9 = vector.load %arg7[%c0_8, %c0_9, %c0_10] : memref<1x16x1xf32, #tpu.memory_space<vmem>>, vector<1x16x1xf32>
    %10 = vector.shape_cast %9 : vector<1x16x1xf32> to vector<16x1xf32>
    %11 = vector.broadcast %10 : vector<16x1xf32> to vector<16x128xf32>
    %12 = arith.mulf %7, %11 : vector<16x128xf32>
    %13 = arith.truncf %12 : vector<16x128xf32> to vector<16x128xbf16>
    %c0_11 = arith.constant 0 : index
    %c0_12 = arith.constant 0 : index
    %c0_13 = arith.constant 0 : index
    %14 = vector.load %arg8[%c0_11, %c0_12, %c0_13] : memref<1x16x1xf32, #tpu.memory_space<vmem>>, vector<1x16x1xf32>
    %15 = vector.shape_cast %14 : vector<1x16x1xf32> to vector<16x1xf32>
    %16 = vector.broadcast %15 : vector<16x1xf32> to vector<16x128xf32>
    %17 = arith.mulf %8, %16 : vector<16x128xf32>
    %18 = arith.truncf %17 : vector<16x128xf32> to vector<16x128xbf16>
    %19 = arith.extf %13 : vector<16x128xbf16> to vector<16x128xf32>
    %20 = arith.extf %18 : vector<16x128xbf16> to vector<16x128xf32>
    %21 = arith.mulf %19, %19 : vector<16x128xf32>
    %cst = arith.constant dense<0.000000e+00> : vector<16xf32>
    %22 = vector.multi_reduction <add>, %21, %cst [1] : vector<16x128xf32> to vector<16xf32>
    %23 = vector.shape_cast %22 : vector<16xf32> to vector<16x1xf32>
    %24 = arith.mulf %20, %20 : vector<16x128xf32>
    %cst_14 = arith.constant dense<0.000000e+00> : vector<16xf32>
    %25 = vector.multi_reduction <add>, %24, %cst_14 [1] : vector<16x128xf32> to vector<16xf32>
    %26 = vector.shape_cast %25 : vector<16xf32> to vector<16x1xf32>
    %cst_15 = arith.constant dense<0.000000e+00> : vector<16x16xf32>
    %27 = tpu.matmul %13, %18, %cst_15 {dimension_numbers = #tpu.dot_dimension_numbers<[1], [1], [0], [0], [0, 0, 1, 0], [], []>} : vector<16x128xbf16>, vector<16x128xbf16>, vector<16x16xf32> -> vector<16x16xf32>
    %28 = tpu.transpose %26, [1, 0] : vector<16x1xf32> -> vector<1x16xf32>
    %29 = vector.broadcast %23 : vector<16x1xf32> to vector<16x16xf32>
    %30 = vector.broadcast %28 : vector<1x16xf32> to vector<16x16xf32>
    %31 = arith.addf %29, %30 : vector<16x16xf32>
    %cst_16 = arith.constant 2.000000e+00 : f32
    %32 = vector.broadcast %cst_16 : f32 to vector<16x16xf32>
    %33 = arith.mulf %32, %27 : vector<16x16xf32>
    %34 = arith.subf %31, %33 : vector<16x16xf32>
    %cst_17 = arith.constant 0.000000e+00 : f32
    %35 = vector.broadcast %cst_17 : f32 to vector<16x16xf32>
    %36 = arith.maximumf %34, %35 : vector<16x16xf32>
    %cst_18 = arith.constant 9.99999974E-5 : f32
    %37 = vector.broadcast %cst_18 : f32 to vector<16x16xf32>
    %38 = arith.addf %36, %37 : vector<16x16xf32>
    %39 = math.rsqrt %38 : vector<16x16xf32>
    %40 = math.tanh %39 : vector<16x16xf32>
    %c0_19 = arith.constant 0 : index
    %c0_20 = arith.constant 0 : index
    %c0_21 = arith.constant 0 : index
    %41 = vector.load %arg9[%c0_19, %c0_20, %c0_21] : memref<1x16x1xf32, #tpu.memory_space<vmem>>, vector<1x16x1xf32>
    %42 = vector.shape_cast %41 : vector<1x16x1xf32> to vector<16x1xf32>
    %43 = vector.broadcast %42 : vector<16x1xf32> to vector<16x16xf32>
    %44 = arith.mulf %40, %43 : vector<16x16xf32>
    %c0_22 = arith.constant 0 : index
    %c0_23 = arith.constant 0 : index
    %c0_24 = arith.constant 0 : index
    %45 = vector.load %arg10[%c0_22, %c0_23, %c0_24] : memref<1x1x16xf32, #tpu.memory_space<vmem>>, vector<1x1x16xf32>
    %46 = vector.shape_cast %45 : vector<1x1x16xf32> to vector<1x16xf32>
    %47 = vector.broadcast %46 : vector<1x16xf32> to vector<16x16xf32>
    %48 = arith.mulf %44, %47 : vector<16x16xf32>
    %c0_i8 = arith.constant 0 : i8
    %49 = vector.broadcast %c0_i8 : i8 to vector<16x16xi8>
    %50 = arith.cmpi ne, %6, %49 : vector<16x16xi8>
    %cst_25 = arith.constant 0.000000e+00 : f32
    %51 = vector.broadcast %cst_25 : f32 to vector<16x16xf32>
    %52 = arith.select %50, %48, %51 : vector<16x16xi1>, vector<16x16xf32>
    %53 = arith.truncf %52 : vector<16x16xf32> to vector<16x16xbf16>
    %54 = arith.truncf %7 : vector<16x128xf32> to vector<16x128xbf16>
    %cst_26 = arith.constant dense<0.000000e+00> : vector<16x128xf32>
    %55 = tpu.matmul %53, %54, %cst_26 {dimension_numbers = #tpu.dot_dimension_numbers<[0], [0], [1], [1], [0, 1, 1, 1], [], []>} : vector<16x16xbf16>, vector<16x128xbf16>, vector<16x128xf32> -> vector<16x128xf32>
    %c0_27 = arith.constant 0 : index
    %c0_28 = arith.constant 0 : index
    %56 = vector.load %arg13[%c0_27, %c0_28] : memref<16x128xf32, #tpu.memory_space<vmem>>, vector<16x128xf32>
    %57 = arith.index_cast %arg1 : i32 to index
    %58 = memref.load %arg3[%57] : memref<3xf32, #tpu.memory_space<smem>>
    %59 = vector.broadcast %58 : f32 to vector<16x128xf32>
    %60 = arith.mulf %59, %55 : vector<16x128xf32>
    %61 = arith.addf %56, %60 : vector<16x128xf32>
    %c0_29 = arith.constant 0 : index
    %c0_30 = arith.constant 0 : index
    %62 = vector.load %arg13[%c0_29, %c0_30] : memref<16x128xf32, #tpu.memory_space<vmem>>, vector<16x128xf32>
    tpu.vector_store %arg13[%c0_29, %c0_30], %61 {strides = array<i32>} : memref<16x128xf32, #tpu.memory_space<vmem>>, vector<16x128xf32>,
    %c2_i32 = arith.constant 2 : i32
    %63 = arith.cmpi eq, %arg1, %c2_i32 : i32
    %c0_i32_31 = arith.constant 0 : i32
    %64 = arith.cmpi eq, %arg2, %c0_i32_31 : i32
    %65 = arith.andi %63, %64 : i1
    %66 = arith.extui %65 : i1 to i32
    %c0_i32_32 = arith.constant 0 : i32
    %67 = arith.cmpi ne, %66, %c0_i32_32 : i32
    scf.if %67 {
      %c0_33 = arith.constant 0 : index
      %c0_34 = arith.constant 0 : index
      %68 = vector.load %arg11[%c0_33, %c0_34] : memref<16x128xf32, #tpu.memory_space<vmem>>, vector<16x128xf32>
      %cst_35 = arith.constant 1.000000e-01 : f32
      %69 = vector.broadcast %cst_35 : f32 to vector<16x128xf32>
      %70 = arith.mulf %69, %68 : vector<16x128xf32>
      %c0_36 = arith.constant 0 : index
      %c0_37 = arith.constant 0 : index
      %71 = vector.load %arg13[%c0_36, %c0_37] : memref<16x128xf32, #tpu.memory_space<vmem>>, vector<16x128xf32>
      %cst_38 = arith.constant 0.899999976 : f32
      %72 = vector.broadcast %cst_38 : f32 to vector<16x128xf32>
      %73 = arith.mulf %72, %71 : vector<16x128xf32>
      %74 = arith.addf %70, %73 : vector<16x128xf32>
      %c0_39 = arith.constant 0 : index
      %c0_40 = arith.constant 0 : index
      %75 = vector.load %arg12[%c0_39, %c0_40] : memref<16x128xf32, #tpu.memory_space<vmem>>, vector<16x128xf32>
      tpu.vector_store %arg12[%c0_39, %c0_40], %74 {strides = array<i32>} : memref<16x128xf32, #tpu.memory_space<vmem>>, vector<16x128xf32>,
    } else {
    }
    return
  }
  func.func @transform_0(%arg0: i32, %arg1: i32, %arg2: i32, %arg3: memref<3xf32, #tpu.memory_space<smem>>) -> (i32, i32, i32) {
    %c0_i32 = arith.constant 0 : i32
    return %arg1, %arg2, %arg0 : i32, i32, i32
  }
  func.func @transform_1(%arg0: i32, %arg1: i32, %arg2: i32, %arg3: memref<3xf32, #tpu.memory_space<smem>>) -> (i32, i32) {
    %c0_i32 = arith.constant 0 : i32
    %c0_i32_0 = arith.constant 0 : i32
    return %arg2, %c0_i32 : i32, i32
  }
  func.func @transform_2(%arg0: i32, %arg1: i32, %arg2: i32, %arg3: memref<3xf32, #tpu.memory_space<smem>>) -> (i32, i32) {
    %c0_i32 = arith.constant 0 : i32
    %c0_i32_0 = arith.constant 0 : i32
    return %arg0, %c0_i32 : i32, i32
  }
  func.func @transform_3(%arg0: i32, %arg1: i32, %arg2: i32, %arg3: memref<3xf32, #tpu.memory_space<smem>>) -> (i32, i32, i32) {
    %c0_i32 = arith.constant 0 : i32
    %c0_i32_0 = arith.constant 0 : i32
    return %arg1, %arg2, %c0_i32 : i32, i32, i32
  }
  func.func @transform_4(%arg0: i32, %arg1: i32, %arg2: i32, %arg3: memref<3xf32, #tpu.memory_space<smem>>) -> (i32, i32, i32) {
    %c0_i32 = arith.constant 0 : i32
    %c0_i32_0 = arith.constant 0 : i32
    return %arg1, %arg0, %c0_i32 : i32, i32, i32
  }
  func.func @transform_5(%arg0: i32, %arg1: i32, %arg2: i32, %arg3: memref<3xf32, #tpu.memory_space<smem>>) -> (i32, i32, i32) {
    %c0_i32 = arith.constant 0 : i32
    %c0_i32_0 = arith.constant 0 : i32
    return %arg1, %arg2, %c0_i32 : i32, i32, i32
  }
  func.func @transform_6(%arg0: i32, %arg1: i32, %arg2: i32, %arg3: memref<3xf32, #tpu.memory_space<smem>>) -> (i32, i32, i32) {
    %c0_i32 = arith.constant 0 : i32
    %c0_i32_0 = arith.constant 0 : i32
    return %arg1, %c0_i32, %arg0 : i32, i32, i32
  }
  func.func @transform_7(%arg0: i32, %arg1: i32, %arg2: i32, %arg3: memref<3xf32, #tpu.memory_space<smem>>) -> (i32, i32) {
    %c0_i32 = arith.constant 0 : i32
    %c0_i32_0 = arith.constant 0 : i32
    return %arg0, %c0_i32 : i32, i32
  }
  func.func @transform_8(%arg0: i32, %arg1: i32, %arg2: i32, %arg3: memref<3xf32, #tpu.memory_space<smem>>) -> (i32, i32) {
    %c0_i32 = arith.constant 0 : i32
    %c0_i32_0 = arith.constant 0 : i32
    return %arg0, %c0_i32 : i32, i32
  }
}

module attributes {stable_mosaic.version = 11 : i64} {
  func.func @_classifier_kernel(%arg0: memref<16x128xf32, #tpu.memory_space<vmem>>, %arg1: memref<4x128xf32, #tpu.memory_space<vmem>>, %arg2: memref<1x4xf32, #tpu.memory_space<vmem>>, %arg3: memref<16x4xf32, #tpu.memory_space<vmem>>, %arg4: memref<16x4xf32, #tpu.memory_space<vmem>>) attributes {dimension_semantics = [], scalar_prefetch = 0 : i64, scratch_operands = 0 : i64, tpu.core_type = #tpu.core_type<tc>} {
    %c0 = arith.constant 0 : index
    %c0_0 = arith.constant 0 : index
    %0 = vector.load %arg0[%c0, %c0_0] : memref<16x128xf32, #tpu.memory_space<vmem>>, vector<16x128xf32>
    %c0_1 = arith.constant 0 : index
    %c0_2 = arith.constant 0 : index
    %1 = vector.load %arg1[%c0_1, %c0_2] : memref<4x128xf32, #tpu.memory_space<vmem>>, vector<4x128xf32>
    %cst = arith.constant dense<0.000000e+00> : vector<16x4xf32>
    %2 = tpu.matmul %0, %1, %cst {dimension_numbers = #tpu.dot_dimension_numbers<[1], [1], [0], [0], [0, 0, 1, 0], [], []>} : vector<16x128xf32>, vector<4x128xf32>, vector<16x4xf32> -> vector<16x4xf32>
    %c0_3 = arith.constant 0 : index
    %c0_4 = arith.constant 0 : index
    %3 = vector.load %arg2[%c0_3, %c0_4] : memref<1x4xf32, #tpu.memory_space<vmem>>, vector<1x4xf32>
    %4 = vector.broadcast %3 : vector<1x4xf32> to vector<16x4xf32>
    %5 = arith.addf %2, %4 : vector<16x4xf32>
    %cst_5 = arith.constant dense<0xFF800000> : vector<16xf32>
    %6 = vector.multi_reduction <maximumf>, %5, %cst_5 [1] : vector<16x4xf32> to vector<16xf32>
    %7 = vector.shape_cast %6 : vector<16xf32> to vector<16x1xf32>
    %8 = vector.broadcast %7 : vector<16x1xf32> to vector<16x4xf32>
    %9 = arith.subf %5, %8 : vector<16x4xf32>
    %10 = math.exp %9 : vector<16x4xf32>
    %cst_6 = arith.constant dense<0.000000e+00> : vector<16xf32>
    %11 = vector.multi_reduction <add>, %10, %cst_6 [1] : vector<16x4xf32> to vector<16xf32>
    %12 = vector.shape_cast %11 : vector<16xf32> to vector<16x1xf32>
    %13 = math.log %12 : vector<16x1xf32>
    %14 = vector.broadcast %13 : vector<16x1xf32> to vector<16x4xf32>
    %15 = arith.subf %9, %14 : vector<16x4xf32>
    %c0_7 = arith.constant 0 : index
    %c0_8 = arith.constant 0 : index
    %16 = vector.load %arg3[%c0_7, %c0_8] : memref<16x4xf32, #tpu.memory_space<vmem>>, vector<16x4xf32>
    tpu.vector_store %arg3[%c0_7, %c0_8], %15 {strides = array<i32>} : memref<16x4xf32, #tpu.memory_space<vmem>>, vector<16x4xf32>,
    %c0_9 = arith.constant 0 : index
    %c0_10 = arith.constant 0 : index
    %17 = vector.load %arg4[%c0_9, %c0_10] : memref<16x4xf32, #tpu.memory_space<vmem>>, vector<16x4xf32>
    tpu.vector_store %arg4[%c0_9, %c0_10], %5 {strides = array<i32>} : memref<16x4xf32, #tpu.memory_space<vmem>>, vector<16x4xf32>,
    return
  }
}

</mosaic_0001>

<llo_original>
// kernel: cgcn_forward.8
$region0: #{cgcn_forward.8}
  #allocation0 [shape = 'u32[]', space=smem, size = 0x4, offset = 0x4, fixed_abs, tag = 'smem constant byte address 0x4 - core index']
  #allocation1 [shape = 'u32[144,128]{1,0:T(1,128)}', space=vmem, size = 0x12000, scoped, tag = 'internal scratch']
  %s0 = inlined_call_operand.vmem [shape: f32[16,8], index: 0, kind: input, shape index: {}]
  %s1 = inlined_call_operand.vmem [shape: f32[128,8], index: 1, kind: input, shape index: {}]
  %s2 = inlined_call_operand.vmem [shape: f32[1,128], index: 2, kind: input, shape index: {}]
  %s3 = inlined_call_operand.vmem [shape: f32[16,128], index: 3, kind: output, shape index: {}]
  %s4 = sld [smem:[#allocation0]]
  $region22: #{cgcn_forward.8} parent=0
    _
  %s6 = ssub.s32 1, %s4
  %s7 = scalar_select 0, %s6, %s4
  // Predicated region
  $region2: #{cgcn_forward.8} parent=0 // pred_check
    _
  $region3: #{cgcn_forward.8} parent=0 // pred_check_branch
    %9 = sbr.rel (0) target = $region5
  $region4: #{cgcn_forward.8} parent=0 // pred_region
    _
  $region5: #{cgcn_forward.8} parent=0 // pred_fallthru
    _
  // Predicated region
  $region6: #{cgcn_forward.8} parent=0 // pred_check
    _
  $region7: #{cgcn_forward.8} parent=0 // pred_check_branch
    %11 = sbr.rel (0) target = $region9
  $region8: #{cgcn_forward.8} parent=0 // pred_region
    _
  $region9: #{cgcn_forward.8} parent=0 // pred_fallthru
    _
  // Predicated region
  $region10: #{cgcn_forward.8} parent=0 // pred_check
    _
  $region11: #{cgcn_forward.8} parent=0 // pred_check_branch
    %13 = sbr.rel (0) target = $region13
  $region12: #{cgcn_forward.8} parent=0 // pred_region
    _
  $region13: #{cgcn_forward.8} parent=0 // pred_fallthru
    _
  %v14 = vld [vmem:[%s0] sm:$0xff]
  %v15 = vld [vmem:[%s0 + $0x8] sm:$0xff]
  %v16 = vld [vmem:[%s1] sm:$0xff]
  %v17 = vld [vmem:[%s1 + $0x8] sm:$0xff]
  %v18 = vld [vmem:[%s1 + $0x10] sm:$0xff]
  %v19 = vld [vmem:[%s1 + $0x18] sm:$0xff]
  %v20 = vld [vmem:[%s1 + $0x20] sm:$0xff]
  %v21 = vld [vmem:[%s1 + $0x28] sm:$0xff]
  %v22 = vld [vmem:[%s1 + $0x30] sm:$0xff]
  %v23 = vld [vmem:[%s1 + $0x38] sm:$0xff]
  %v24 = vld [vmem:[%s1 + $0x40] sm:$0xff]
  %v25 = vld [vmem:[%s1 + $0x48] sm:$0xff]
  %v26 = vld [vmem:[%s1 + $0x50] sm:$0xff]
  %v27 = vld [vmem:[%s1 + $0x58] sm:$0xff]
  %v28 = vld [vmem:[%s1 + $0x60] sm:$0xff]
  %v29 = vld [vmem:[%s1 + $0x68] sm:$0xff]
  %v30 = vld [vmem:[%s1 + $0x70] sm:$0xff]
  %v31 = vld [vmem:[%s1 + $0x78] sm:$0xff]
  %v32 = vld [vmem:[%s2] sm:$0x1]
  %v34 = vlaneseq
  %v35 = vshrl.u32 %v34, 7
  %v36 = vsub.s32 0, %v35
  %v37 = vrot.slane %v32, %v36
  %vm39 = vcmask 64512
  %v41 = vsel %vm39, %v14, 0
  %v44 = vsel %vm39, %v15, 0
  %v47 = vsel %vm39, %v16, 0
  %v50 = vsel %vm39, %v17, 0
  %v53 = vsel %vm39, %v18, 0
  %v56 = vsel %vm39, %v19, 0
  %v59 = vsel %vm39, %v20, 0
  %v62 = vsel %vm39, %v21, 0
  %v65 = vsel %vm39, %v22, 0
  %v68 = vsel %vm39, %v23, 0
  %v71 = vsel %vm39, %v24, 0
  %v74 = vsel %vm39, %v25, 0
  %v77 = vsel %vm39, %v26, 0
  %v80 = vsel %vm39, %v27, 0
  %v83 = vsel %vm39, %v28, 0
  %v86 = vsel %vm39, %v29, 0
  %v89 = vsel %vm39, %v30, 0
  %v92 = vsel %vm39, %v31, 0
  %94 = vmatprep.subr.mxu0 0.0
  %95 = vmatpush1.xpose.msra.mxu0 %v47
  %96 = vmatprep.subr.mxu0 0.0
  %97 = vmatpush1.xpose.msra.mxu0 %v50
  %98 = vmatprep.subr.mxu0 0.0
  %99 = vmatpush1.xpose.msra.mxu0 %v53
  %100 = vmatprep.subr.mxu0 0.0
  %101 = vmatpush1.xpose.msra.mxu0 %v56
  %102 = vmatprep.subr.mxu0 0.0
  %103 = vmatpush1.xpose.msra.mxu0 %v59
  %104 = vmatprep.subr.mxu0 0.0
  %105 = vmatpush1.xpose.msra.mxu0 %v62
  %106 = vmatprep.subr.mxu0 0.0
  %107 = vmatpush1.xpose.msra.mxu0 %v65
  %108 = vmatprep.subr.mxu0 0.0
  %109 = vmatpush1.xpose.msra.mxu0 %v68
  %110 = vmatprep.subr.mxu0 0.0
  %111 = vmatpush1.xpose.msra.mxu0 %v71
  %112 = vmatprep.subr.mxu0 0.0
  %113 = vmatpush1.xpose.msra.mxu0 %v74
  %114 = vmatprep.subr.mxu0 0.0
  %115 = vmatpush1.xpose.msra.mxu0 %v77
  %116 = vmatprep.subr.mxu0 0.0
  %117 = vmatpush1.xpose.msra.mxu0 %v80
  %118 = vmatprep.subr.mxu0 0.0
  %119 = vmatpush1.xpose.msra.mxu0 %v83
  %120 = vmatprep.subr.mxu0 0.0
  %121 = vmatpush1.xpose.msra.mxu0 %v86
  %122 = vmatprep.subr.mxu0 0.0
  %123 = vmatpush1.xpose.msra.mxu0 %v89
  %124 = vmatprep.subr.mxu0 0.0
  %125 = vmatpush1.xpose.msra.mxu0 %v92
  %126 = vmatprep.subr.mxu0 0.0
  %127 = vmatpush1.xpose.msra.mxu0 0.0
  %128 = vmatprep.subr.mxu0 0.0
  %129 = vmatpush1.xpose.msra.mxu0 0.0
  %130 = vmatprep.subr.mxu0 0.0
  %131 = vmatpush1.xpose.msra.mxu0 0.0
  %132 = vmatprep.subr.mxu0 0.0
  %133 = vmatpush1.xpose.msra.mxu0 0.0
  %134 = vmatprep.subr.mxu0 0.0
  %135 = vmatpush1.xpose.msra.mxu0 0.0
  %136 = vmatprep.subr.mxu0 0.0
  %137 = vmatpush1.xpose.msra.mxu0 0.0
  %138 = vmatprep.subr.mxu0 0.0
  %139 = vmatpush1.xpose.msra.mxu0 0.0
  %140 = vmatprep.subr.mxu0 0.0
  %141 = vmatpush1.xpose.msra.mxu0 0.0
  %142 = vmatprep.subr.mxu0 0.0
  %143 = vmatpush1.xpose.msra.mxu0 0.0
  %144 = vmatprep.subr.mxu0 0.0
  %145 = vmatpush1.xpose.msra.mxu0 0.0
  %146 = vmatprep.subr.mxu0 0.0
  %147 = vmatpush1.xpose.msra.mxu0 0.0
  %148 = vmatprep.subr.mxu0 0.0
  %149 = vmatpush1.xpose.msra.mxu0 0.0
  %150 = vmatprep.subr.mxu0 0.0
  %151 = vmatpush1.xpose.msra.mxu0 0.0
  %152 = vmatprep.subr.mxu0 0.0
  %153 = vmatpush1.xpose.msra.mxu0 0.0
  %154 = vmatprep.subr.mxu0 0.0
  %155 = vmatpush1.xpose.msra.mxu0 0.0
  %156 = vmatprep.subr.mxu0 0.0
  %157 = vmatpush1.xpose.msra.mxu0 0.0
  %158 = vmatprep.mubr.f32.mxu0 0.0
  %159 = vmatmul.mubr.f32.gmra.mrb[0].mxu0 %v41
  %v160 = vpop.f32.mrb[0].mxu0
  %v161 = vadd.f32 %v37, %v160
  %v162 = vpop.f32.mrb[0].mxu0
  %163 = vmatprep.mubr.f32.mxu0 0.0
  %164 = vmatmul.mubr.f32.gmra.mrb[0].mxu0 %v44
  %v165 = vpop.f32.mrb[0].mxu0
  %v166 = vadd.f32 %v37, %v165
  %v167 = vpop.f32.mrb[0].mxu0
  %168 = vdwg.mxu0
  %v169 = vmax.f32 %v161, 0.0
  %v170 = vmax.f32 %v166, 0.0
  %171 = vst [vmem:[%s3] sm:$0xff] %v169
  %172 = vst [vmem:[%s3 + $0x8] sm:$0xff] %v170
  // Predicated region
  $region14: #{cgcn_forward.8} parent=0 // pred_check
    _
  $region15: #{cgcn_forward.8} parent=0 // pred_check_branch
    %174 = sbr.rel (0) target = $region17
  $region16: #{cgcn_forward.8} parent=0 // pred_region
    _
  $region17: #{cgcn_forward.8} parent=0 // pred_fallthru
    _
  // Predicated region
  $region18: #{cgcn_forward.8} parent=0 // pred_check
    _
  $region19: #{cgcn_forward.8} parent=0 // pred_check_branch
    %176 = sbr.rel (0) target = $region21
  $region20: #{cgcn_forward.8} parent=0 // pred_region
    _
  $region21: #{cgcn_forward.8} parent=0 // pred_fallthru
    _

// kernel: cgcn_forward.7
$region0: #{cgcn_forward.7}
  #allocation0 [shape = 'u32[]', space=smem, size = 0x4, offset = 0x4, fixed_abs, tag = 'smem constant byte address 0x4 - core index']
  #allocation1 [shape = 'u32[144,128]{1,0:T(1,128)}', space=vmem, size = 0x12000, scoped, tag = 'internal scratch']
  %s0 = inlined_call_operand.vmem [shape: s8[3,16,16], index: 0, kind: input, shape index: {}]
  %s1 = inlined_call_operand.vmem [shape: f32[3,16,1], index: 1, kind: output, shape index: {0}]
  %s2 = inlined_call_operand.vmem [shape: f32[3,16,1], index: 2, kind: output, shape index: {1}]
  %s3 = inlined_call_operand.vmem [shape: f32[3,1,16], index: 3, kind: output, shape index: {2}]
  %s4 = inlined_call_operand.vmem [shape: f32[3,16,1], index: 4, kind: output, shape index: {3}]
  %5 = xla_tuple %s1, %s2, %s3, %s4
  %s6 = sld [smem:[#allocation0]]
  $region61: #{cgcn_forward.7} parent=0
    _
  %s8 = ssub.s32 1, %s6
  %s9 = scalar_select 0, %s8, %s6
  loop: start=0, step=1, limit=5
  $region2: #{cgcn_forward.7} parent=0 // loop_pre_header
    _
  $region3: #{cgcn_forward.7} parent=0 // loop_header
    %s11 = sphi 0, %s15
    %p12 = scmp.ge.s32.totalorder %s11, 5
    %s21 = sphi 0, %s23
    %s24 = sphi 0, %s21
    %s25 = sphi 0, %s24
    %s41 = sphi 0, %s25
    %s47 = sphi 0, %s49
    %s50 = sphi 0, %s47
    %s51 = sphi 0, %s50
    %s67 = sphi 0, %s51
    %s73 = sphi 0, %s75
    %s76 = sphi 0, %s73
    %s77 = sphi 0, %s76
    %s93 = sphi 0, %s77
    %s99 = sphi 0, %s101
    %s102 = sphi 0, %s99
    %s103 = sphi 0, %s102
    %s119 = sphi 0, %s103
    %s125 = sphi 0, %s127
    %s128 = sphi 0, %s125
    %s129 = sphi 0, %s128
    %s145 = sphi 0, %s129
  $region4: #{cgcn_forward.7} parent=0 // loop_header_branch
    %14 = sbr.rel (%p12) target = $region8
  $region5: #{cgcn_forward.7} parent=0 // loop_body
    %s16 = ssub.s32 %s11, 1
    %s17 = ssub.s32 %s11, 2
    %s18 = sadd.s32 %s11, 1
    %s19 = ssub.s32 %s11, %s18
    %p20 = scmp.eq.s32.totalorder %s19, 0
    %s22 = sadd.s32 %s21, 1
    %s23 = scalar_select %p20, %s21, %s22
    %p26 = pneg %p20
    %p27 = scmp.eq.s32.totalorder %s11, 2
    %p28 = por %p26, %p27
    %p29 = scmp.ne.s32.totalorder %s21, %s24
    %p30 = scmp.eq.s32.totalorder %s11, 0
    %p31 = por %p29, %p30
    %p32 = scmp.ne.s32.totalorder %s21, %s24
    %p33 = scmp.eq.s32.totalorder %s16, 2
    %p34 = por %p32, %p33
    %p35 = scmp.ne.s32.totalorder %s24, %s25
    %p36 = scmp.eq.s32.totalorder %s16, 0
    %p37 = por %p35, %p36
    %p38 = scmp.ne.s32.totalorder %s24, %s25
    %p39 = scmp.eq.s32.totalorder %s17, 2
    %p40 = por %p38, %p39
    %p42 = scmp.ne.s32.totalorder %s25, %s41
    %p43 = scmp.eq.s32.totalorder %s17, 0
    %p44 = por %p42, %p43
    %s45 = ssub.s32 %s11, %s18
    %p46 = scmp.eq.s32.totalorder %s45, 0
    %s48 = sadd.s32 %s47, 1
    %s49 = scalar_select %p46, %s47, %s48
    %p52 = pneg %p46
    %p53 = scmp.eq.s32.totalorder %s11, 2
    %p54 = por %p52, %p53
    %p55 = scmp.ne.s32.totalorder %s47, %s50
    %p56 = scmp.eq.s32.totalorder %s11, 0
    %p57 = por %p55, %p56
    %p58 = scmp.ne.s32.totalorder %s47, %s50
    %p59 = scmp.eq.s32.totalorder %s16, 2
    %p60 = por %p58, %p59
    %p61 = scmp.ne.s32.totalorder %s50, %s51
    %p62 = scmp.eq.s32.totalorder %s16, 0
    %p63 = por %p61, %p62
    %p64 = scmp.ne.s32.totalorder %s50, %s51
    %p65 = scmp.eq.s32.totalorder %s17, 2
    %p66 = por %p64, %p65
    %p68 = scmp.ne.s32.totalorder %s51, %s67
    %p69 = scmp.eq.s32.totalorder %s17, 0
    %p70 = por %p68, %p69
    %s71 = ssub.s32 %s11, %s18
    %p72 = scmp.eq.s32.totalorder %s71, 0
    %s74 = sadd.s32 %s73, 1
    %s75 = scalar_select %p72, %s73, %s74
    %p78 = pneg %p72
    %p79 = scmp.eq.s32.totalorder %s11, 2
    %p80 = por %p78, %p79
    %p81 = scmp.ne.s32.totalorder %s73, %s76
    %p82 = scmp.eq.s32.totalorder %s11, 0
    %p83 = por %p81, %p82
    %p84 = scmp.ne.s32.totalorder %s73, %s76
    %p85 = scmp.eq.s32.totalorder %s16, 2
    %p86 = por %p84, %p85
    %p87 = scmp.ne.s32.totalorder %s76, %s77
    %p88 = scmp.eq.s32.totalorder %s16, 0
    %p89 = por %p87, %p88
    %p90 = scmp.ne.s32.totalorder %s76, %s77
    %p91 = scmp.eq.s32.totalorder %s17, 2
    %p92 = por %p90, %p91
    %p94 = scmp.ne.s32.totalorder %s77, %s93
    %p95 = scmp.eq.s32.totalorder %s17, 0
    %p96 = por %p94, %p95
    %s97 = ssub.s32 %s11, %s18
    %p98 = scmp.eq.s32.totalorder %s97, 0
    %s100 = sadd.s32 %s99, 1
    %s101 = scalar_select %p98, %s99, %s100
    %p104 = pneg %p98
    %p105 = scmp.eq.s32.totalorder %s11, 2
    %p106 = por %p104, %p105
    %p107 = scmp.ne.s32.totalorder %s99, %s102
    %p108 = scmp.eq.s32.totalorder %s11, 0
    %p109 = por %p107, %p108
    %p110 = scmp.ne.s32.totalorder %s99, %s102
    %p111 = scmp.eq.s32.totalorder %s16, 2
    %p112 = por %p110, %p111
    %p113 = scmp.ne.s32.totalorder %s102, %s103
    %p114 = scmp.eq.s32.totalorder %s16, 0
    %p115 = por %p113, %p114
    %p116 = scmp.ne.s32.totalorder %s102, %s103
    %p117 = scmp.eq.s32.totalorder %s17, 2
    %p118 = por %p116, %p117
    %p120 = scmp.ne.s32.totalorder %s103, %s119
    %p121 = scmp.eq.s32.totalorder %s17, 0
    %p122 = por %p120, %p121
    %s123 = ssub.s32 %s11, %s18
    %p124 = scmp.eq.s32.totalorder %s123, 0
    %s126 = sadd.s32 %s125, 1
    %s127 = scalar_select %p124, %s125, %s126
    %p130 = pneg %p124
    %p131 = scmp.eq.s32.totalorder %s11, 2
    %p132 = por %p130, %p131
    %p133 = scmp.ne.s32.totalorder %s125, %s128
    %p134 = scmp.eq.s32.totalorder %s11, 0
    %p135 = por %p133, %p134
    %p136 = scmp.ne.s32.totalorder %s125, %s128
    %p137 = scmp.eq.s32.totalorder %s16, 2
    %p138 = por %p136, %p137
    %p139 = scmp.ne.s32.totalorder %s128, %s129
    %p140 = scmp.eq.s32.totalorder %s16, 0
    %p141 = por %p139, %p140
    %p142 = scmp.ne.s32.totalorder %s128, %s129
    %p143 = scmp.eq.s32.totalorder %s17, 2
    %p144 = por %p142, %p143
    %p146 = scmp.ne.s32.totalorder %s129, %s145
    %p147 = scmp.eq.s32.totalorder %s17, 0
    %p148 = por %p146, %p147
    %p149 = scmp.le.s32.totalorder 1, %s11
    %p150 = scmp.lt.s32.totalorder %s11, 4
    %p151 = pnand %p149, %p150
    %p152 = pneg %p151
    // Predicated region
    $region9: #{cgcn_forward.7} parent=5 // pred_check
      _
    $region10: #{cgcn_forward.7} parent=5 // pred_check_branch
      %154 = sbr.rel (%p151) target = $region12
    $region11: #{cgcn_forward.7} parent=5 // pred_region
      %s155 = ssub.s32 %s11, 1
    $region12: #{cgcn_forward.7} parent=5 // pred_fallthru
      _
    %p156 = scmp.lt.s32.totalorder %s11, 3
    // Predicated region
    $region13: #{cgcn_forward.7} parent=5 // pred_check
      %p157 = pneg %p156
    $region14: #{cgcn_forward.7} parent=5 // pred_check_branch
      %159 = sbr.rel (%p157) target = $region16
    $region15: #{cgcn_forward.7} parent=5 // pred_region
      // Predicated region
      $region17: #{cgcn_forward.7} parent=15 // pred_check
        %p160 = pneg %p31
      $region18: #{cgcn_forward.7} parent=15 // pred_check_branch
        %162 = sbr.rel (%p160) target = $region20
      $region19: #{cgcn_forward.7} parent=15 // pred_region
        %p163 = scmp.lt.s32.totalorder %s11, 2
        %s164 = scalar_select %p163, %s11, 2
        %s165 = smul.addr %s164, 2
        %s166 = smul.addr %s165, 2
        %s167 = scalar_lea.vmem %s0, %s166
      $region20: #{cgcn_forward.7} parent=15 // pred_fallthru
        _
    $region16: #{cgcn_forward.7} parent=5 // pred_fallthru
      _
    %p168 = scmp.le.s32.totalorder 1, %s11
    %p169 = scmp.lt.s32.totalorder %s11, 4
    %p170 = pnand %p168, %p169
    %p171 = pneg %p170
    // Predicated region
    $region21: #{cgcn_forward.7} parent=5 // pred_check
      _
    $region22: #{cgcn_forward.7} parent=5 // pred_check_branch
      %173 = sbr.rel (%p170) target = $region24
    $region23: #{cgcn_forward.7} parent=5 // pred_region
      %s174 = ssub.s32 %s11, 1
      %p175 = scmp.lt.s32.totalorder %s16, 2
      %s176 = scalar_select %p175, %s16, 2
      %s177 = smul.addr %s176, 2
      %s178 = smul.addr %s177, 2
      %s179 = scalar_lea.vmem %s0, %s178
      %p180 = pneg %p37
      %p181 = pneg %p34
      %p182 = pneg %p63
      %p183 = pneg %p60
      %p184 = scmp.lt.s32.totalorder %s16, 2
      %s185 = scalar_select %p184, %s16, 2
      %s186 = smul.addr %s185, 2
      %s187 = smul.addr %s186, 8
      %s188 = scalar_lea.vmem %s1, %s187
      %p189 = pneg %p89
      %p190 = pneg %p86
      %p191 = scmp.lt.s32.totalorder %s16, 2
      %s192 = scalar_select %p191, %s16, 2
      %s193 = smul.addr %s192, 2
      %s194 = smul.addr %s193, 8
      %s195 = scalar_lea.vmem %s2, %s194
      %p196 = pneg %p115
      %p197 = pneg %p112
      %p198 = scmp.lt.s32.totalorder %s16, 2
      %s199 = scalar_select %p198, %s16, 2
      %s200 = scalar_lea.vmem %s3, %s199
      %p201 = pneg %p141
      %p202 = pneg %p138
      %p203 = scmp.lt.s32.totalorder %s16, 2
      %s204 = scalar_select %p203, %s16, 2
      %s205 = smul.addr %s204, 2
      %s206 = smul.addr %s205, 8
      %s207 = scalar_lea.vmem %s4, %s206
      %p208 = scmp.lt.s32.totalorder %s16, 2
      %s209 = scalar_select %p208, %s16, 2
      %s210 = smul.addr %s209, 2
      %s211 = smul.addr %s210, 2
      %s212 = scalar_lea.vmem %s0, %s211
      %p213 = scmp.lt.s32.totalorder %s16, 2
      %s214 = scalar_select %p213, %s16, 2
      %s215 = smul.addr %s214, 2
      %s216 = smul.addr %s215, 8
      %s217 = scalar_lea.vmem %s1, %s216
      %p218 = scmp.lt.s32.totalorder %s16, 2
      %s219 = scalar_select %p218, %s16, 2
      %s220 = smul.addr %s219, 2
      %s221 = smul.addr %s220, 8
      %s222 = scalar_lea.vmem %s2, %s221
      %p223 = scmp.lt.s32.totalorder %s16, 2
      %s224 = scalar_select %p223, %s16, 2
      %s225 = scalar_lea.vmem %s3, %s224
      %p226 = scmp.lt.s32.totalorder %s16, 2
      %s227 = scalar_select %p226, %s16, 2
      %s228 = smul.addr %s227, 2
      %s229 = smul.addr %s228, 8
      %s230 = scalar_lea.vmem %s4, %s229
      %v233 = vld [vmem:[%s212] sm:$0x3]
      %v234 = vld [vmem:[%s212 + $0x2] sm:$0x3]
      %vm235 = vnez %v233
      %vm236 = vnez %v234
      %v237 = vsel %vm235, 16843009, 0
      %v238 = vsel %vm236, 16843009, 0
      %v239 = vunpack.c.0.s8 %v237
      %v240 = vunpack.c.0.s8 %v238
      %vm241 = vcmp.ne.s32.totalorder %v239, 0
      %vm242 = vcmp.ne.s32.totalorder %v240, 0
      %v243 = vsel %vm241, 1, 0
      %v244 = vsel %vm242, 1, 0
      %v245 = vcvt.s32.f32 %v243
      %v246 = vcvt.s32.f32 %v244
      %vm247 = vcmask 130048
      %v248 = vsel %vm247, %v245, 0.0
      %249 = vadd.xlane.f32.xlu0 %v248
      %v250 = vpop.xlane.xlu0 %249
      %v251 = vsel %vm247, %v246, 0.0
      %252 = vadd.xlane.f32.xlu0 %v251
      %v253 = vpop.xlane.xlu0 %252
      %v254 = vmax.f32 %v250, 1.0
      %v255 = vmax.f32 %v253, 1.0
      %v256 = vrsqrt.pop %v254
      %v257 = vmul.f32 %v254, %v256
      %vm258 = vcmp.eq.f32.partialorder %v254, inf
      %v259 = vsel %vm258, %v254, %v257
      %vm260 = vcmp.eq.f32.partialorder %v254, 0.0
      %v261 = vand.u32 %v254, 2147483648
      %v262 = vsel %vm260, %v261, %v259
      %v263 = vrsqrt.pop %v255
      %v264 = vmul.f32 %v255, %v263
      %vm265 = vcmp.eq.f32.partialorder %v255, inf
      %v266 = vsel %vm265, %v255, %v264
      %vm267 = vcmp.eq.f32.partialorder %v255, 0.0
      %v268 = vand.u32 %v255, 2147483648
      %v269 = vsel %vm267, %v268, %v266
      %v270 = vrsqrt.pop %v262
      %v271 = vrsqrt.pop %v269
      %vm272 = vcmask 7168
      %273 = vst.msk [vmem:[%s217] sm:$0xff] %vm272, %v270
      %274 = vst.msk [vmem:[%s217 + $0x8] sm:$0xff] %vm272, %v271
      %v275 = vrsqrt.pop %v254
      %v276 = vrsqrt.pop %v255
      %277 = vst.msk [vmem:[%s222] sm:$0xff] %vm272, %v275
      %278 = vst.msk [vmem:[%s222 + $0x8] sm:$0xff] %vm272, %v276
      %v280 = vsel %vm247, 1.0, 0
      %v283 = vsel %vm247, %v245, 0
      %v286 = vsel %vm247, %v246, 0
      %288 = vmatprep.subr.mxu0 0.0
      %289 = vmatpush1.xpose.msra.mxu0 %v283
      %290 = vmatprep.subr.mxu0 0.0
      %291 = vmatpush1.xpose.msra.mxu0 %v286
      %292 = vmatprep.subr.mxu0 0.0
      %293 = vmatpush1.xpose.msra.mxu0 0.0
      %294 = vmatprep.subr.mxu0 0.0
      %295 = vmatpush1.xpose.msra.mxu0 0.0
      %296 = vmatprep.subr.mxu0 0.0
      %297 = vmatpush1.xpose.msra.mxu0 0.0
      %298 = vmatprep.subr.mxu0 0.0
      %299 = vmatpush1.xpose.msra.mxu0 0.0
      %300 = vmatprep.subr.mxu0 0.0
      %301 = vmatpush1.xpose.msra.mxu0 0.0
      %302 = vmatprep.subr.mxu0 0.0
      %303 = vmatpush1.xpose.msra.mxu0 0.0
      %304 = vmatprep.subr.mxu0 0.0
      %305 = vmatpush1.xpose.msra.mxu0 0.0
      %306 = vmatprep.subr.mxu0 0.0
      %307 = vmatpush1.xpose.msra.mxu0 0.0
      %308 = vmatprep.subr.mxu0 0.0
      %309 = vmatpush1.xpose.msra.mxu0 0.0
      %310 = vmatprep.subr.mxu0 0.0
      %311 = vmatpush1.xpose.msra.mxu0 0.0
      %312 = vmatprep.subr.mxu0 0.0
      %313 = vmatpush1.xpose.msra.mxu0 0.0
      %314 = vmatprep.subr.mxu0 0.0
      %315 = vmatpush1.xpose.msra.mxu0 0.0
      %316 = vmatprep.subr.mxu0 0.0
      %317 = vmatpush1.xpose.msra.mxu0 0.0
      %318 = vmatprep.subr.mxu0 0.0
      %319 = vmatpush1.xpose.msra.mxu0 0.0
      %320 = vmatprep.subr.mxu0 0.0
      %321 = vmatpush1.xpose.msra.mxu0 0.0
      %322 = vmatprep.subr.mxu0 0.0
      %323 = vmatpush1.xpose.msra.mxu0 0.0
      %324 = vmatprep.subr.mxu0 0.0
      %325 = vmatpush1.xpose.msra.mxu0 0.0
      %326 = vmatprep.subr.mxu0 0.0
      %327 = vmatpush1.xpose.msra.mxu0 0.0
      %328 = vmatprep.subr.mxu0 0.0
      %329 = vmatpush1.xpose.msra.mxu0 0.0
      %330 = vmatprep.subr.mxu0 0.0
      %331 = vmatpush1.xpose.msra.mxu0 0.0
      %332 = vmatprep.subr.mxu0 0.0
      %333 = vmatpush1.xpose.msra.mxu0 0.0
      %334 = vmatprep.subr.mxu0 0.0
      %335 = vmatpush1.xpose.msra.mxu0 0.0
      %336 = vmatprep.subr.mxu0 0.0
      %337 = vmatpush1.xpose.msra.mxu0 0.0
      %338 = vmatprep.subr.mxu0 0.0
      %339 = vmatpush1.xpose.msra.mxu0 0.0
      %340 = vmatprep.subr.mxu0 0.0
      %341 = vmatpush1.xpose.msra.mxu0 0.0
      %342 = vmatprep.subr.mxu0 0.0
      %343 = vmatpush1.xpose.msra.mxu0 0.0
      %344 = vmatprep.subr.mxu0 0.0
      %345 = vmatpush1.xpose.msra.mxu0 0.0
      %346 = vmatprep.subr.mxu0 0.0
      %347 = vmatpush1.xpose.msra.mxu0 0.0
      %348 = vmatprep.subr.mxu0 0.0
      %349 = vmatpush1.xpose.msra.mxu0 0.0
      %350 = vmatprep.subr.mxu0 0.0
      %351 = vmatpush1.xpose.msra.mxu0 0.0
      %352 = vmatprep.mubr.f32.mxu0 0.0
      %353 = vmatmul.mubr.f32.gmra.mrb[0].mxu0 %v280
      %v354 = vpop.f32.mrb[0].mxu0
      %v355 = vadd.f32 0.0, %v354
      %v356 = vpop.f32.mrb[0].mxu0
      %357 = vdwg.mxu0
      %v358 = vmax.f32 %v355, 1.0
      %v359 = vrsqrt.pop %v358
      %vm360 = vcmask 122880
      %361 = vst.msk [vmem:[%s225] sm:$0x1] %vm360, %v359
      %362 = vst.msk [vmem:[%s230] sm:$0xff] %vm272, %v250
      %363 = vst.msk [vmem:[%s230 + $0x8] sm:$0xff] %vm272, %v253
      %p364 = scmp.lt.s32.totalorder %s16, 2
      %s365 = scalar_select %p364, %s16, 2
      %s366 = smul.addr %s365, 2
      %s367 = smul.addr %s366, 8
      %s368 = scalar_lea.vmem %s1, %s367
      %p369 = scmp.lt.s32.totalorder %s16, 2
      %s370 = scalar_select %p369, %s16, 2
      %s371 = smul.addr %s370, 2
      %s372 = smul.addr %s371, 8
      %s373 = scalar_lea.vmem %s2, %s372
      %p374 = scmp.lt.s32.totalorder %s16, 2
      %s375 = scalar_select %p374, %s16, 2
      %s376 = scalar_lea.vmem %s3, %s375
      %p377 = scmp.lt.s32.totalorder %s16, 2
      %s378 = scalar_select %p377, %s16, 2
      %s379 = smul.addr %s378, 2
      %s380 = smul.addr %s379, 8
      %s381 = scalar_lea.vmem %s4, %s380
      // Predicated region
      $region25: #{cgcn_forward.7} parent=23 // pred_check
        %p382 = pneg %p60
      $region26: #{cgcn_forward.7} parent=23 // pred_check_branch
        %384 = sbr.rel (%p382) target = $region28
      $region27: #{cgcn_forward.7} parent=23 // pred_region
        _
      $region28: #{cgcn_forward.7} parent=23 // pred_fallthru
        _
      // Predicated region
      $region29: #{cgcn_forward.7} parent=23 // pred_check
        %p385 = pneg %p86
      $region30: #{cgcn_forward.7} parent=23 // pred_check_branch
        %387 = sbr.rel (%p385) target = $region32
      $region31: #{cgcn_forward.7} parent=23 // pred_region
        _
      $region32: #{cgcn_forward.7} parent=23 // pred_fallthru
        _
      // Predicated region
      $region33: #{cgcn_forward.7} parent=23 // pred_check
        %p388 = pneg %p112
      $region34: #{cgcn_forward.7} parent=23 // pred_check_branch
        %390 = sbr.rel (%p388) target = $region36
      $region35: #{cgcn_forward.7} parent=23 // pred_region
        _
      $region36: #{cgcn_forward.7} parent=23 // pred_fallthru
        _
      // Predicated region
      $region37: #{cgcn_forward.7} parent=23 // pred_check
        %p391 = pneg %p138
      $region38: #{cgcn_forward.7} parent=23 // pred_check_branch
        %393 = sbr.rel (%p391) target = $region40
      $region39: #{cgcn_forward.7} parent=23 // pred_region
        _
      $region40: #{cgcn_forward.7} parent=23 // pred_fallthru
        _
    $region24: #{cgcn_forward.7} parent=5 // pred_fallthru
      _
    %p394 = scmp.le.s32.totalorder 2, %s11
    // Predicated region
    $region41: #{cgcn_forward.7} parent=5 // pred_check
      %p395 = pneg %p394
    $region42: #{cgcn_forward.7} parent=5 // pred_check_branch
      %397 = sbr.rel (%p395) target = $region44
    $region43: #{cgcn_forward.7} parent=5 // pred_region
      %s398 = ssub.s32 %s11, 2
      // Predicated region
      $region45: #{cgcn_forward.7} parent=43 // pred_check
        %p399 = pneg %p66
      $region46: #{cgcn_forward.7} parent=43 // pred_check_branch
        %401 = sbr.rel (%p399) target = $region48
      $region47: #{cgcn_forward.7} parent=43 // pred_region
        %p402 = scmp.lt.s32.totalorder %s17, 2
        %s403 = scalar_select %p402, %s17, 2
        %s404 = smul.addr %s403, 2
        %s405 = smul.addr %s404, 8
        %s406 = scalar_lea.vmem %s1, %s405
      $region48: #{cgcn_forward.7} parent=43 // pred_fallthru
        _
      // Predicated region
      $region49: #{cgcn_forward.7} parent=43 // pred_check
        %p407 = pneg %p92
      $region50: #{cgcn_forward.7} parent=43 // pred_check_branch
        %409 = sbr.rel (%p407) target = $region52
      $region51: #{cgcn_forward.7} parent=43 // pred_region
        %p410 = scmp.lt.s32.totalorder %s17, 2
        %s411 = scalar_select %p410, %s17, 2
        %s412 = smul.addr %s411, 2
        %s413 = smul.addr %s412, 8
        %s414 = scalar_lea.vmem %s2, %s413
      $region52: #{cgcn_forward.7} parent=43 // pred_fallthru
        _
      // Predicated region
      $region53: #{cgcn_forward.7} parent=43 // pred_check
        %p415 = pneg %p118
      $region54: #{cgcn_forward.7} parent=43 // pred_check_branch
        %417 = sbr.rel (%p415) target = $region56
      $region55: #{cgcn_forward.7} parent=43 // pred_region
        %p418 = scmp.lt.s32.totalorder %s17, 2
        %s419 = scalar_select %p418, %s17, 2
        %s420 = scalar_lea.vmem %s3, %s419
      $region56: #{cgcn_forward.7} parent=43 // pred_fallthru
        _
      // Predicated region
      $region57: #{cgcn_forward.7} parent=43 // pred_check
        %p421 = pneg %p144
      $region58: #{cgcn_forward.7} parent=43 // pred_check_branch
        %423 = sbr.rel (%p421) target = $region60
      $region59: #{cgcn_forward.7} parent=43 // pred_region
        %p424 = scmp.lt.s32.totalorder %s17, 2
        %s425 = scalar_select %p424, %s17, 2
        %s426 = smul.addr %s425, 2
        %s427 = smul.addr %s426, 8
        %s428 = scalar_lea.vmem %s4, %s427
      $region60: #{cgcn_forward.7} parent=43 // pred_fallthru
        _
    $region44: #{cgcn_forward.7} parent=5 // pred_fallthru
      _
  $region6: #{cgcn_forward.7} parent=0 // loop_footer
    %s15 = sadd.s32 1, %s11
  $region7: #{cgcn_forward.7} parent=0 // loop_footer_branch
    %10 = sbr.rel target = $region3
  $region8: #{cgcn_forward.7} parent=0 // loop_exit
    _

// kernel: cgcn_forward.9
$region0: #{cgcn_forward.9}
  #allocation0 [shape = 'u32[]', space=smem, size = 0x4, offset = 0x4, fixed_abs, tag = 'smem constant byte address 0x4 - core index']
  #allocation1 [shape = 'u32[144,128]{1,0:T(1,128)}', space=vmem, size = 0x12000, scoped, tag = 'internal scratch']
  %s0 = inlined_call_operand.vmem [shape: s8[3,16,16], index: 0, kind: input, shape index: {}]
  %s1 = inlined_call_operand.vmem [shape: f32[16,128], index: 1, kind: input, shape index: {}]
  %s2 = inlined_call_operand.vmem [shape: f32[3,16,1], index: 2, kind: input, shape index: {}]
  %s3 = inlined_call_operand.vmem [shape: f32[3,16,1], index: 3, kind: input, shape index: {}]
  %s4 = inlined_call_operand.vmem [shape: f32[3,1,1], index: 4, kind: output, shape index: {}]
  %s5 = sld [smem:[#allocation0]]
  $region49: #{cgcn_forward.9} parent=0
    _
  %s7 = ssub.s32 1, %s5
  %s8 = scalar_select 0, %s7, %s5
  loop: start=0, step=1, limit=5
  $region2: #{cgcn_forward.9} parent=0 // loop_pre_header
    _
  $region3: #{cgcn_forward.9} parent=0 // loop_header
    %s10 = sphi 0, %s14
    %p11 = scmp.ge.s32.totalorder %s10, 5
    %s20 = sphi 0, %s22
    %s23 = sphi 0, %s20
    %s24 = sphi 0, %s23
    %s40 = sphi 0, %s24
    %s44 = sphi 0, %s44
    %s46 = sphi 0, %s44
    %s47 = sphi 0, %s46
    %s61 = sphi 0, %s47
    %s67 = sphi 0, %s69
    %s70 = sphi 0, %s67
    %s71 = sphi 0, %s70
    %s87 = sphi 0, %s71
    %s93 = sphi 0, %s95
    %s96 = sphi 0, %s93
    %s97 = sphi 0, %s96
    %s113 = sphi 0, %s97
    %s119 = sphi 0, %s121
    %s122 = sphi 0, %s119
    %s123 = sphi 0, %s122
    %s139 = sphi 0, %s123
  $region4: #{cgcn_forward.9} parent=0 // loop_header_branch
    %13 = sbr.rel (%p11) target = $region8
  $region5: #{cgcn_forward.9} parent=0 // loop_body
    %s15 = ssub.s32 %s10, 1
    %s16 = ssub.s32 %s10, 2
    %s17 = sadd.s32 %s10, 1
    %s18 = ssub.s32 %s10, %s17
    %p19 = scmp.eq.s32.totalorder %s18, 0
    %s21 = sadd.s32 %s20, 1
    %s22 = scalar_select %p19, %s20, %s21
    %p25 = pneg %p19
    %p26 = scmp.eq.s32.totalorder %s10, 2
    %p27 = por %p25, %p26
    %p28 = scmp.ne.s32.totalorder %s20, %s23
    %p29 = scmp.eq.s32.totalorder %s10, 0
    %p30 = por %p28, %p29
    %p31 = scmp.ne.s32.totalorder %s20, %s23
    %p32 = scmp.eq.s32.totalorder %s15, 2
    %p33 = por %p31, %p32
    %p34 = scmp.ne.s32.totalorder %s23, %s24
    %p35 = scmp.eq.s32.totalorder %s15, 0
    %p36 = por %p34, %p35
    %p37 = scmp.ne.s32.totalorder %s23, %s24
    %p38 = scmp.eq.s32.totalorder %s16, 2
    %p39 = por %p37, %p38
    %p41 = scmp.ne.s32.totalorder %s24, %s40
    %p42 = scmp.eq.s32.totalorder %s16, 0
    %p43 = por %p41, %p42
    %s45 = sadd.s32 %s44, 1
    %p48 = scmp.eq.s32.totalorder %s10, 2
    %p49 = scmp.ne.s32.totalorder %s44, %s46
    %p50 = scmp.eq.s32.totalorder %s10, 0
    %p51 = por %p49, %p50
    %p52 = scmp.ne.s32.totalorder %s44, %s46
    %p53 = scmp.eq.s32.totalorder %s15, 2
    %p54 = por %p52, %p53
    %p55 = scmp.ne.s32.totalorder %s46, %s47
    %p56 = scmp.eq.s32.totalorder %s15, 0
    %p57 = por %p55, %p56
    %p58 = scmp.ne.s32.totalorder %s46, %s47
    %p59 = scmp.eq.s32.totalorder %s16, 2
    %p60 = por %p58, %p59
    %p62 = scmp.ne.s32.totalorder %s47, %s61
    %p63 = scmp.eq.s32.totalorder %s16, 0
    %p64 = por %p62, %p63
    %s65 = ssub.s32 %s10, %s17
    %p66 = scmp.eq.s32.totalorder %s65, 0
    %s68 = sadd.s32 %s67, 1
    %s69 = scalar_select %p66, %s67, %s68
    %p72 = pneg %p66
    %p73 = scmp.eq.s32.totalorder %s10, 2
    %p74 = por %p72, %p73
    %p75 = scmp.ne.s32.totalorder %s67, %s70
    %p76 = scmp.eq.s32.totalorder %s10, 0
    %p77 = por %p75, %p76
    %p78 = scmp.ne.s32.totalorder %s67, %s70
    %p79 = scmp.eq.s32.totalorder %s15, 2
    %p80 = por %p78, %p79
    %p81 = scmp.ne.s32.totalorder %s70, %s71
    %p82 = scmp.eq.s32.totalorder %s15, 0
    %p83 = por %p81, %p82
    %p84 = scmp.ne.s32.totalorder %s70, %s71
    %p85 = scmp.eq.s32.totalorder %s16, 2
    %p86 = por %p84, %p85
    %p88 = scmp.ne.s32.totalorder %s71, %s87
    %p89 = scmp.eq.s32.totalorder %s16, 0
    %p90 = por %p88, %p89
    %s91 = ssub.s32 %s10, %s17
    %p92 = scmp.eq.s32.totalorder %s91, 0
    %s94 = sadd.s32 %s93, 1
    %s95 = scalar_select %p92, %s93, %s94
    %p98 = pneg %p92
    %p99 = scmp.eq.s32.totalorder %s10, 2
    %p100 = por %p98, %p99
    %p101 = scmp.ne.s32.totalorder %s93, %s96
    %p102 = scmp.eq.s32.totalorder %s10, 0
    %p103 = por %p101, %p102
    %p104 = scmp.ne.s32.totalorder %s93, %s96
    %p105 = scmp.eq.s32.totalorder %s15, 2
    %p106 = por %p104, %p105
    %p107 = scmp.ne.s32.totalorder %s96, %s97
    %p108 = scmp.eq.s32.totalorder %s15, 0
    %p109 = por %p107, %p108
    %p110 = scmp.ne.s32.totalorder %s96, %s97
    %p111 = scmp.eq.s32.totalorder %s16, 2
    %p112 = por %p110, %p111
    %p114 = scmp.ne.s32.totalorder %s97, %s113
    %p115 = scmp.eq.s32.totalorder %s16, 0
    %p116 = por %p114, %p115
    %s117 = ssub.s32 %s10, %s17
    %p118 = scmp.eq.s32.totalorder %s117, 0
    %s120 = sadd.s32 %s119, 1
    %s121 = scalar_select %p118, %s119, %s120
    %p124 = pneg %p118
    %p125 = scmp.eq.s32.totalorder %s10, 2
    %p126 = por %p124, %p125
    %p127 = scmp.ne.s32.totalorder %s119, %s122
    %p128 = scmp.eq.s32.totalorder %s10, 0
    %p129 = por %p127, %p128
    %p130 = scmp.ne.s32.totalorder %s119, %s122
    %p131 = scmp.eq.s32.totalorder %s15, 2
    %p132 = por %p130, %p131
    %p133 = scmp.ne.s32.totalorder %s122, %s123
    %p134 = scmp.eq.s32.totalorder %s15, 0
    %p135 = por %p133, %p134
    %p136 = scmp.ne.s32.totalorder %s122, %s123
    %p137 = scmp.eq.s32.totalorder %s16, 2
    %p138 = por %p136, %p137
    %p140 = scmp.ne.s32.totalorder %s123, %s139
    %p141 = scmp.eq.s32.totalorder %s16, 0
    %p142 = por %p140, %p141
    %p143 = scmp.le.s32.totalorder 1, %s10
    %p144 = scmp.lt.s32.totalorder %s10, 4
    %p145 = pnand %p143, %p144
    %p146 = pneg %p145
    // Predicated region
    $region9: #{cgcn_forward.9} parent=5 // pred_check
      _
    $region10: #{cgcn_forward.9} parent=5 // pred_check_branch
      %148 = sbr.rel (%p145) target = $region12
    $region11: #{cgcn_forward.9} parent=5 // pred_region
      %s149 = ssub.s32 %s10, 1
      // Predicated region
      $region13: #{cgcn_forward.9} parent=11 // pred_check
        %p150 = pneg %p57
      $region14: #{cgcn_forward.9} parent=11 // pred_check_branch
        %152 = sbr.rel (%p150) target = $region16
      $region15: #{cgcn_forward.9} parent=11 // pred_region
        _
      $region16: #{cgcn_forward.9} parent=11 // pred_fallthru
        _
    $region12: #{cgcn_forward.9} parent=5 // pred_fallthru
      _
    %p153 = scmp.lt.s32.totalorder %s10, 3
    // Predicated region
    $region17: #{cgcn_forward.9} parent=5 // pred_check
      %p154 = pneg %p153
    $region18: #{cgcn_forward.9} parent=5 // pred_check_branch
      %156 = sbr.rel (%p154) target = $region20
    $region19: #{cgcn_forward.9} parent=5 // pred_region
      // Predicated region
      $region21: #{cgcn_forward.9} parent=19 // pred_check
        %p157 = pneg %p30
      $region22: #{cgcn_forward.9} parent=19 // pred_check_branch
        %159 = sbr.rel (%p157) target = $region24
      $region23: #{cgcn_forward.9} parent=19 // pred_region
        %p160 = scmp.lt.s32.totalorder %s10, 2
        %s161 = scalar_select %p160, %s10, 2
        %s162 = smul.addr %s161, 2
        %s163 = smul.addr %s162, 2
        %s164 = scalar_lea.vmem %s0, %s163
      $region24: #{cgcn_forward.9} parent=19 // pred_fallthru
        _
      // Predicated region
      $region25: #{cgcn_forward.9} parent=19 // pred_check
        %p165 = pneg %p77
      $region26: #{cgcn_forward.9} parent=19 // pred_check_branch
        %167 = sbr.rel (%p165) target = $region28
      $region27: #{cgcn_forward.9} parent=19 // pred_region
        %p168 = scmp.lt.s32.totalorder %s10, 2
        %s169 = scalar_select %p168, %s10, 2
        %s170 = smul.addr %s169, 2
        %s171 = smul.addr %s170, 8
        %s172 = scalar_lea.vmem %s2, %s171
      $region28: #{cgcn_forward.9} parent=19 // pred_fallthru
        _
      // Predicated region
      $region29: #{cgcn_forward.9} parent=19 // pred_check
        %p173 = pneg %p103
      $region30: #{cgcn_forward.9} parent=19 // pred_check_branch
        %175 = sbr.rel (%p173) target = $region32
      $region31: #{cgcn_forward.9} parent=19 // pred_region
        %p176 = scmp.lt.s32.totalorder %s10, 2
        %s177 = scalar_select %p176, %s10, 2
        %s178 = smul.addr %s177, 2
        %s179 = smul.addr %s178, 8
        %s180 = scalar_lea.vmem %s3, %s179
      $region32: #{cgcn_forward.9} parent=19 // pred_fallthru
        _
    $region20: #{cgcn_forward.9} parent=5 // pred_fallthru
      _
    %p181 = scmp.le.s32.totalorder 1, %s10
    %p182 = scmp.lt.s32.totalorder %s10, 4
    %p183 = pnand %p181, %p182
    %p184 = pneg %p183
    // Predicated region
    $region33: #{cgcn_forward.9} parent=5 // pred_check
      _
    $region34: #{cgcn_forward.9} parent=5 // pred_check_branch
      %186 = sbr.rel (%p183) target = $region36
    $region35: #{cgcn_forward.9} parent=5 // pred_region
      %s187 = ssub.s32 %s10, 1
      %p188 = scmp.lt.s32.totalorder %s15, 2
      %s189 = scalar_select %p188, %s15, 2
      %s190 = smul.addr %s189, 2
      %s191 = smul.addr %s190, 2
      %s192 = scalar_lea.vmem %s0, %s191
      %p193 = pneg %p36
      %p194 = pneg %p33
      %p195 = pneg %p57
      %p196 = pneg %p54
      %p197 = scmp.lt.s32.totalorder %s15, 2
      %s198 = scalar_select %p197, %s15, 2
      %s199 = smul.addr %s198, 2
      %s200 = smul.addr %s199, 8
      %s201 = scalar_lea.vmem %s2, %s200
      %p202 = pneg %p83
      %p203 = pneg %p80
      %p204 = scmp.lt.s32.totalorder %s15, 2
      %s205 = scalar_select %p204, %s15, 2
      %s206 = smul.addr %s205, 2
      %s207 = smul.addr %s206, 8
      %s208 = scalar_lea.vmem %s3, %s207
      %p209 = pneg %p109
      %p210 = pneg %p106
      %p211 = pneg %p135
      %p212 = pneg %p132
      %p213 = scmp.lt.s32.totalorder %s15, 2
      %s214 = scalar_select %p213, %s15, 2
      %s215 = scalar_lea.vmem %s4, %s214
      %p216 = scmp.lt.s32.totalorder %s15, 2
      %s217 = scalar_select %p216, %s15, 2
      %s218 = smul.addr %s217, 2
      %s219 = smul.addr %s218, 2
      %s220 = scalar_lea.vmem %s0, %s219
      %p221 = scmp.lt.s32.totalorder %s15, 2
      %s222 = scalar_select %p221, %s15, 2
      %s223 = smul.addr %s222, 2
      %s224 = smul.addr %s223, 8
      %s225 = scalar_lea.vmem %s2, %s224
      %p226 = scmp.lt.s32.totalorder %s15, 2
      %s227 = scalar_select %p226, %s15, 2
      %s228 = smul.addr %s227, 2
      %s229 = smul.addr %s228, 8
      %s230 = scalar_lea.vmem %s3, %s229
      %p231 = scmp.lt.s32.totalorder %s15, 2
      %s232 = scalar_select %p231, %s15, 2
      %s233 = scalar_lea.vmem %s4, %s232
      %v237 = vld [vmem:[%s220] sm:$0x3]
      %v238 = vld [vmem:[%s220 + $0x2] sm:$0x3]
      %vm239 = vnez %v237
      %vm240 = vnez %v238
      %v241 = vsel %vm239, 16843009, 0
      %v242 = vsel %vm240, 16843009, 0
      %v243 = vunpack.c.0.s8 %v241
      %v244 = vunpack.c.0.s8 %v242
      %vm245 = vcmp.ne.s32.totalorder %v243, 0
      %vm246 = vcmp.ne.s32.totalorder %v244, 0
      %v247 = vsel %vm245, 1, 0
      %v248 = vsel %vm246, 1, 0
      %v249 = vcvt.s32.f32 %v247
      %v250 = vcvt.s32.f32 %v248
      %v251 = vpack.c.bf16 %v250, %v249
      %v252 = vld [vmem:[%s1] sm:$0xff]
      %v253 = vld [vmem:[%s1 + $0x8] sm:$0xff]
      %v254 = vld [vmem:[%s225] sm:$0xff]
      %v255 = vld [vmem:[%s225 + $0x8] sm:$0xff]
      %257 = vset.pattern.permute.xlu0 0
      %258 = vperm.xlu0 %257, %v254
      %v259 = vpop.permute.xlu0 %258
      %262 = vset.pattern.permute.xlu0 0
      %263 = vperm.xlu0 %262, %v255
      %v264 = vpop.permute.xlu0 %263
      %v266 = vmul.f32 %v252, %v259
      %v267 = vmul.f32 %v253, %v264
      %v268 = vpack.c.bf16 %v267, %v266
      %v269 = vunpack.c.l.bf16 %v268
      %v270 = vunpack.c.h.bf16 %v268
      %v271 = vmul.f32 %v269, %v269
      %v272 = vmul.f32 %v270, %v270
      %273 = vadd.xlane.f32.xlu0 %v271
      %v274 = vpop.xlane.xlu0 %273
      %275 = vadd.xlane.f32.xlu0 %v272
      %v276 = vpop.xlane.xlu0 %275
      %vm277 = vcmask 130048
      %v279 = vsel %vm277, %v251, 0
      %281 = vmatprep.subr.bf16.mxu0 0
      %282 = vmatpush1.bf16.msra.mxu0 %v268
      %283 = vmatprep.subr.bf16.mxu0 0
      %284 = vmatpush1.bf16.msra.mxu0 0
      %285 = vmatprep.subr.bf16.mxu0 0
      %286 = vmatpush1.bf16.msra.mxu0 0
      %287 = vmatprep.subr.bf16.mxu0 0
      %288 = vmatpush1.bf16.msra.mxu0 0
      %289 = vmatprep.subr.bf16.mxu0 0
      %290 = vmatpush1.bf16.msra.mxu0 0
      %291 = vmatprep.subr.bf16.mxu0 0
      %292 = vmatpush1.bf16.msra.mxu0 0
      %293 = vmatprep.subr.bf16.mxu0 0
      %294 = vmatpush1.bf16.msra.mxu0 0
      %295 = vmatprep.subr.bf16.mxu0 0
      %296 = vmatpush1.bf16.msra.mxu0 0
      %297 = vmatprep.subr.bf16.mxu0 0
      %298 = vmatpush1.bf16.msra.mxu0 0
      %299 = vmatprep.subr.bf16.mxu0 0
      %300 = vmatpush1.bf16.msra.mxu0 0
      %301 = vmatprep.subr.bf16.mxu0 0
      %302 = vmatpush1.bf16.msra.mxu0 0
      %303 = vmatprep.subr.bf16.mxu0 0
      %304 = vmatpush1.bf16.msra.mxu0 0
      %305 = vmatprep.subr.bf16.mxu0 0
      %306 = vmatpush1.bf16.msra.mxu0 0
      %307 = vmatprep.subr.bf16.mxu0 0
      %308 = vmatpush1.bf16.msra.mxu0 0
      %309 = vmatprep.subr.bf16.mxu0 0
      %310 = vmatpush1.bf16.msra.mxu0 0
      %311 = vmatprep.subr.bf16.mxu0 0
      %312 = vmatpush1.bf16.msra.mxu0 0
      %313 = vmatprep.mubr.bf16.mxu0 0
      %314 = vmatmul.mubr.bf16.gmra.mrb[0].mxu0 %v279
      %v315 = vpop.f32.mrb[0].mxu0
      %v316 = vadd.f32 0.0, %v315
      %v317 = vpop.f32.mrb[0].mxu0
      %v318 = vpop.f32.mrb[0].mxu0
      %v319 = vadd.f32 0.0, %v318
      %v320 = vpop.f32.mrb[0].mxu0
      %321 = vdwg.mxu0
      %v322 = vmul.f32 %v269, %v316
      %v323 = vmul.f32 %v270, %v319
      %v324 = vadd.f32 %v322, %v323
      %325 = vadd.xlane.f32.xlu0 %v324
      %v326 = vpop.xlane.xlu0 %325
      %v327 = vrot.slane %v326, 4
      %v328 = vadd.f32 %v326, %v327
      %v329 = vrot.slane %v328, 2
      %v330 = vadd.f32 %v328, %v329
      %v331 = vrot.slane %v330, 1
      %v332 = vadd.f32 %v330, %v331
      %s333 = vtos %v332
      %v334 = vpack.c.bf16 %v276, %v274
      %335 = vmatprep.subr.bf16.mxu0 0
      %336 = vmatpush1.bf16.msra.mxu0 %v334
      %337 = vmatprep.subr.bf16.mxu0 0
      %338 = vmatpush1.bf16.msra.mxu0 0
      %339 = vmatprep.subr.bf16.mxu0 0
      %340 = vmatpush1.bf16.msra.mxu0 0
      %341 = vmatprep.subr.bf16.mxu0 0
      %342 = vmatpush1.bf16.msra.mxu0 0
      %343 = vmatprep.subr.bf16.mxu0 0
      %344 = vmatpush1.bf16.msra.mxu0 0
      %345 = vmatprep.subr.bf16.mxu0 0
      %346 = vmatpush1.bf16.msra.mxu0 0
      %347 = vmatprep.subr.bf16.mxu0 0
      %348 = vmatpush1.bf16.msra.mxu0 0
      %349 = vmatprep.subr.bf16.mxu0 0
      %350 = vmatpush1.bf16.msra.mxu0 0
      %351 = vmatprep.subr.bf16.mxu0 0
      %352 = vmatpush1.bf16.msra.mxu0 0
      %353 = vmatprep.subr.bf16.mxu0 0
      %354 = vmatpush1.bf16.msra.mxu0 0
      %355 = vmatprep.subr.bf16.mxu0 0
      %356 = vmatpush1.bf16.msra.mxu0 0
      %357 = vmatprep.subr.bf16.mxu0 0
      %358 = vmatpush1.bf16.msra.mxu0 0
      %359 = vmatprep.subr.bf16.mxu0 0
      %360 = vmatpush1.bf16.msra.mxu0 0
      %361 = vmatprep.subr.bf16.mxu0 0
      %362 = vmatpush1.bf16.msra.mxu0 0
      %363 = vmatprep.subr.bf16.mxu0 0
      %364 = vmatpush1.bf16.msra.mxu0 0
      %365 = vmatprep.subr.bf16.mxu0 0
      %366 = vmatpush1.bf16.msra.mxu0 0
      %367 = vmatprep.mubr.bf16.mxu0 0
      %368 = vmatmul.mubr.bf16.gmra.mrb[0].mxu0 %v279
      %v369 = vpop.f32.mrb[0].mxu0
      %v370 = vadd.f32 0.0, %v369
      %v371 = vpop.f32.mrb[0].mxu0
      %v372 = vpop.f32.mrb[0].mxu0
      %v373 = vadd.f32 0.0, %v372
      %v374 = vpop.f32.mrb[0].mxu0
      %375 = vdwg.mxu0
      %vm376 = vcmask 7168
      %v377 = vsel %vm376, %v370, 0.0
      %v378 = vsel %vm376, %v373, 0.0
      %v379 = vadd.f32 %v377, %v378
      %380 = vadd.xlane.f32.xlu0 %v379
      %v381 = vpop.xlane.xlu0 %380
      %v382 = vrot.slane %v381, 4
      %v383 = vadd.f32 %v381, %v382
      %v384 = vrot.slane %v383, 2
      %v385 = vadd.f32 %v383, %v384
      %v386 = vrot.slane %v385, 1
      %v387 = vadd.f32 %v385, %v386
      %s388 = vtos %v387
      %v389 = vld [vmem:[%s230] sm:$0xff]
      %v390 = vld [vmem:[%s230 + $0x8] sm:$0xff]
      %v391 = vmul.f32 %v389, %v274
      %v392 = vmul.f32 %v390, %v276
      %v393 = vsel %vm376, %v391, 0.0
      %v394 = vsel %vm376, %v392, 0.0
      %v395 = vadd.f32 %v393, %v394
      %396 = vadd.xlane.f32.xlu0 %v395
      %v397 = vpop.xlane.xlu0 %396
      %v398 = vrot.slane %v397, 4
      %v399 = vadd.f32 %v397, %v398
      %v400 = vrot.slane %v399, 2
      %v401 = vadd.f32 %v399, %v400
      %v402 = vrot.slane %v401, 1
      %v403 = vadd.f32 %v401, %v402
      %s404 = vtos %v403
      %v405 = vsel %vm376, %v389, 0.0
      %v406 = vsel %vm376, %v390, 0.0
      %v407 = vadd.f32 %v405, %v406
      %408 = vadd.xlane.f32.xlu0 %v407
      %v409 = vpop.xlane.xlu0 %408
      %v410 = vrot.slane %v409, 4
      %v411 = vadd.f32 %v409, %v410
      %v412 = vrot.slane %v411, 2
      %v413 = vadd.f32 %v411, %v412
      %v414 = vrot.slane %v413, 1
      %v415 = vadd.f32 %v413, %v414
      %s416 = vtos %v415
      %s417 = smax.f32 %s416, 1.0
      %s418 = sadd.f32 %s404, %s388
      %s419 = smul.f32 %s333, 2.0
      %s420 = ssub.f32 %s418, %s419
      %s421 = smax.f32 %s420, 0.0
      %v422 = vstv %s417
      %v423 = vrcp.pop %v422
      %s424 = vtos %v423
      %s425 = smul.f32 %s421, %s424
      %v426 = vstv %s425
      %vm427 = vcmask 0
      %428 = vst.msk [vmem:[%s233] sm:$0x1] %vm427, %v426
      %p429 = scmp.lt.s32.totalorder %s15, 2
      %s430 = scalar_select %p429, %s15, 2
      %s431 = scalar_lea.vmem %s4, %s430
      // Predicated region
      $region37: #{cgcn_forward.9} parent=35 // pred_check
        %p432 = pneg %p132
      $region38: #{cgcn_forward.9} parent=35 // pred_check_branch
        %434 = sbr.rel (%p432) target = $region40
      $region39: #{cgcn_forward.9} parent=35 // pred_region
        _
      $region40: #{cgcn_forward.9} parent=35 // pred_fallthru
        _
    $region36: #{cgcn_forward.9} parent=5 // pred_fallthru
      _
    %p435 = scmp.le.s32.totalorder 2, %s10
    // Predicated region
    $region41: #{cgcn_forward.9} parent=5 // pred_check
      %p436 = pneg %p435
    $region42: #{cgcn_forward.9} parent=5 // pred_check_branch
      %438 = sbr.rel (%p436) target = $region44
    $region43: #{cgcn_forward.9} parent=5 // pred_region
      %s439 = ssub.s32 %s10, 2
      // Predicated region
      $region45: #{cgcn_forward.9} parent=43 // pred_check
        %p440 = pneg %p138
      $region46: #{cgcn_forward.9} parent=43 // pred_check_branch
        %442 = sbr.rel (%p440) target = $region48
      $region47: #{cgcn_forward.9} parent=43 // pred_region
        %p443 = scmp.lt.s32.totalorder %s16, 2
        %s444 = scalar_select %p443, %s16, 2
        %s445 = scalar_lea.vmem %s4, %s444
      $region48: #{cgcn_forward.9} parent=43 // pred_fallthru
        _
    $region44: #{cgcn_forward.9} parent=5 // pred_fallthru
      _
  $region6: #{cgcn_forward.9} parent=0 // loop_footer
    %s14 = sadd.s32 1, %s10
  $region7: #{cgcn_forward.9} parent=0 // loop_footer_branch
    %9 = sbr.rel target = $region3
  $region8: #{cgcn_forward.9} parent=0 // loop_exit
    _

// kernel: cgcn_forward.10
$region0: #{cgcn_forward.10}
  #allocation0 [shape = 'u32[]', space=smem, size = 0x4, offset = 0x4, fixed_abs, tag = 'smem constant byte address 0x4 - core index']
  #allocation1 [shape = 'u32[144,128]{1,0:T(1,128)}', space=vmem, size = 0x12000, scoped, tag = 'internal scratch']
  #allocation2 [shape = 'f32[16,128]{1,0:T(8,128)}', space=vmem, size = 0x2000, scoped, tag = 'scratch operand']
  #allocation3 [shape = 's32[1]{0}', space=sflag, size = 0x4, scoped, tag = 'scoped memory for cgcn_forward.10']
  #allocation4 [shape = 'u8[512]{0}', space=smem, size = 0x200, scoped, tag = 'prefetched SMEM operand 0']
  %s0 = inlined_call_operand.vmem [shape: f32[3], index: 0, kind: input, shape index: {}]
  %s1 = inlined_call_operand.vmem [shape: s8[3,16,16], index: 1, kind: input, shape index: {}]
  %s2 = inlined_call_operand.vmem [shape: f32[16,128], index: 2, kind: input, shape index: {}, may-alias: {2,3,8}]
  %s3 = inlined_call_operand.vmem [shape: f32[16,128], index: 3, kind: input, shape index: {}, may-alias: {2,3,8}]
  %s4 = inlined_call_operand.vmem [shape: f32[3,16,1], index: 4, kind: input, shape index: {}, may-alias: {4,5}]
  %s5 = inlined_call_operand.vmem [shape: f32[3,16,1], index: 5, kind: input, shape index: {}, may-alias: {4,5}]
  %s6 = inlined_call_operand.vmem [shape: f32[3,16,1], index: 6, kind: input, shape index: {}]
  %s7 = inlined_call_operand.vmem [shape: f32[3,1,16], index: 7, kind: input, shape index: {}]
  %s8 = inlined_call_operand.vmem [shape: f32[16,128], index: 8, kind: input, shape index: {}, may-alias: {2,3,8}]
  %s9 = inlined_call_operand.vmem [shape: f32[16,128], index: 9, kind: output, shape index: {}]
  %s10 = sld [smem:[#allocation0]]
  $region73: #{cgcn_forward.10} parent=0
    _
  %s12 = ssub.s32 1, %s10
  %s13 = scalar_select 0, %s12, %s10
  %s14 = sshll.u32 %s0, 4
  %s15 = int_to_ptr.vmem [resolvable:$true] %s14
  %17 = dma.vmem_to_smem %s15, 16, [#allocation4], [#allocation3]
  %18 = dma.done [#allocation3], 16
  %19 = sfence
  loop: start=0, step=1, limit=5
  $region2: #{cgcn_forward.10} parent=0 // loop_pre_header
    _
  $region3: #{cgcn_forward.10} parent=0 // loop_header
    %s21 = sphi 0, %s25
    %p22 = scmp.ge.s32.totalorder %s21, 5
    %s28 = sphi 0, %s47
    %s29 = sphi 0, %s43
    %s30 = sphi 0, %s39
    %s31 = sphi 0, %s28
    %s32 = sphi 0, %s29
    %s33 = sphi 0, %s30
    %s34 = sphi 0, %s31
    %s35 = sphi 0, %s32
    %s36 = sphi 0, %s33
    %s54 = sphi 0, %s56
    %s57 = sphi 0, %s54
    %s58 = sphi 0, %s57
    %s74 = sphi 0, %s58
    %s80 = sphi 0, %s82
    %s83 = sphi 0, %s80
    %s84 = sphi 0, %s83
    %s100 = sphi 0, %s84
    %s106 = sphi 0, %s108
    %s109 = sphi 0, %s106
    %s110 = sphi 0, %s109
    %s126 = sphi 0, %s110
    %s134 = sphi 0, %s136
    %s137 = sphi 0, %s134
    %s138 = sphi 0, %s137
    %s154 = sphi 0, %s138
    %s162 = sphi 0, %s164
    %s165 = sphi 0, %s162
    %s166 = sphi 0, %s165
    %s182 = sphi 0, %s166
    %s190 = sphi 0, %s192
    %s193 = sphi 0, %s190
    %s194 = sphi 0, %s193
    %s210 = sphi 0, %s194
    %s218 = sphi 0, %s220
    %s221 = sphi 0, %s218
    %s222 = sphi 0, %s221
    %s238 = sphi 0, %s222
    %s244 = sphi 0, %s246
    %s247 = sphi 0, %s244
    %s248 = sphi 0, %s247
    %s264 = sphi 0, %s248
    %s270 = sphi 0, %s272
    %s273 = sphi 0, %s270
    %s274 = sphi 0, %s273
    %s290 = sphi 0, %s274
  $region4: #{cgcn_forward.10} parent=0 // loop_header_branch
    %24 = sbr.rel (%p22) target = $region8
  $region5: #{cgcn_forward.10} parent=0 // loop_body
    %s26 = ssub.s32 %s21, 1
    %s27 = ssub.s32 %s21, 2
    %s37 = sadd.s32 1, %s30
    %p38 = scmp.ge.s32.totalorder %s37, 1
    %s39 = scalar_select %p38, 0, %s37
    %s40 = sadd.s32 1, %s29
    %s41 = scalar_select %p38, %s40, %s29
    %p42 = scmp.ge.s32.totalorder %s41, 3
    %s43 = scalar_select %p42, 0, %s41
    %s44 = sadd.s32 1, %s28
    %s45 = scalar_select %p42, %s44, %s28
    %p46 = scmp.ge.s32.totalorder %s45, 1
    %s47 = scalar_select %p46, 0, %s45
    %s48 = ssub.s32 %s29, %s43
    %s49 = ssub.s32 %s30, %s39
    %s50 = sor.u32 %s48, %s49
    %s51 = ssub.s32 %s28, %s47
    %s52 = sor.u32 %s50, %s51
    %p53 = scmp.eq.s32.totalorder %s52, 0
    %s55 = sadd.s32 %s54, 1
    %s56 = scalar_select %p53, %s54, %s55
    %p59 = pneg %p53
    %p60 = scmp.eq.s32.totalorder %s21, 2
    %p61 = por %p59, %p60
    %p62 = scmp.ne.s32.totalorder %s54, %s57
    %p63 = scmp.eq.s32.totalorder %s21, 0
    %p64 = por %p62, %p63
    %p65 = scmp.ne.s32.totalorder %s54, %s57
    %p66 = scmp.eq.s32.totalorder %s26, 2
    %p67 = por %p65, %p66
    %p68 = scmp.ne.s32.totalorder %s57, %s58
    %p69 = scmp.eq.s32.totalorder %s26, 0
    %p70 = por %p68, %p69
    %p71 = scmp.ne.s32.totalorder %s57, %s58
    %p72 = scmp.eq.s32.totalorder %s27, 2
    %p73 = por %p71, %p72
    %p75 = scmp.ne.s32.totalorder %s58, %s74
    %p76 = scmp.eq.s32.totalorder %s27, 0
    %p77 = por %p75, %p76
    %s78 = ssub.s32 %s30, %s39
    %p79 = scmp.eq.s32.totalorder %s78, 0
    %s81 = sadd.s32 %s80, 1
    %s82 = scalar_select %p79, %s80, %s81
    %p85 = pneg %p79
    %p86 = scmp.eq.s32.totalorder %s21, 2
    %p87 = por %p85, %p86
    %p88 = scmp.ne.s32.totalorder %s80, %s83
    %p89 = scmp.eq.s32.totalorder %s21, 0
    %p90 = por %p88, %p89
    %p91 = scmp.ne.s32.totalorder %s80, %s83
    %p92 = scmp.eq.s32.totalorder %s26, 2
    %p93 = por %p91, %p92
    %p94 = scmp.ne.s32.totalorder %s83, %s84
    %p95 = scmp.eq.s32.totalorder %s26, 0
    %p96 = por %p94, %p95
    %p97 = scmp.ne.s32.totalorder %s83, %s84
    %p98 = scmp.eq.s32.totalorder %s27, 2
    %p99 = por %p97, %p98
    %p101 = scmp.ne.s32.totalorder %s84, %s100
    %p102 = scmp.eq.s32.totalorder %s27, 0
    %p103 = por %p101, %p102
    %s104 = ssub.s32 %s28, %s47
    %p105 = scmp.eq.s32.totalorder %s104, 0
    %s107 = sadd.s32 %s106, 1
    %s108 = scalar_select %p105, %s106, %s107
    %p111 = pneg %p105
    %p112 = scmp.eq.s32.totalorder %s21, 2
    %p113 = por %p111, %p112
    %p114 = scmp.ne.s32.totalorder %s106, %s109
    %p115 = scmp.eq.s32.totalorder %s21, 0
    %p116 = por %p114, %p115
    %p117 = scmp.ne.s32.totalorder %s106, %s109
    %p118 = scmp.eq.s32.totalorder %s26, 2
    %p119 = por %p117, %p118
    %p120 = scmp.ne.s32.totalorder %s109, %s110
    %p121 = scmp.eq.s32.totalorder %s26, 0
    %p122 = por %p120, %p121
    %p123 = scmp.ne.s32.totalorder %s109, %s110
    %p124 = scmp.eq.s32.totalorder %s27, 2
    %p125 = por %p123, %p124
    %p127 = scmp.ne.s32.totalorder %s110, %s126
    %p128 = scmp.eq.s32.totalorder %s27, 0
    %p129 = por %p127, %p128
    %s130 = ssub.s32 %s29, %s43
    %s131 = ssub.s32 %s30, %s39
    %s132 = sor.u32 %s130, %s131
    %p133 = scmp.eq.s32.totalorder %s132, 0
    %s135 = sadd.s32 %s134, 1
    %s136 = scalar_select %p133, %s134, %s135
    %p139 = pneg %p133
    %p140 = scmp.eq.s32.totalorder %s21, 2
    %p141 = por %p139, %p140
    %p142 = scmp.ne.s32.totalorder %s134, %s137
    %p143 = scmp.eq.s32.totalorder %s21, 0
    %p144 = por %p142, %p143
    %p145 = scmp.ne.s32.totalorder %s134, %s137
    %p146 = scmp.eq.s32.totalorder %s26, 2
    %p147 = por %p145, %p146
    %p148 = scmp.ne.s32.totalorder %s137, %s138
    %p149 = scmp.eq.s32.totalorder %s26, 0
    %p150 = por %p148, %p149
    %p151 = scmp.ne.s32.totalorder %s137, %s138
    %p152 = scmp.eq.s32.totalorder %s27, 2
    %p153 = por %p151, %p152
    %p155 = scmp.ne.s32.totalorder %s138, %s154
    %p156 = scmp.eq.s32.totalorder %s27, 0
    %p157 = por %p155, %p156
    %s158 = ssub.s32 %s29, %s43
    %s159 = ssub.s32 %s28, %s47
    %s160 = sor.u32 %s158, %s159
    %p161 = scmp.eq.s32.totalorder %s160, 0
    %s163 = sadd.s32 %s162, 1
    %s164 = scalar_select %p161, %s162, %s163
    %p167 = pneg %p161
    %p168 = scmp.eq.s32.totalorder %s21, 2
    %p169 = por %p167, %p168
    %p170 = scmp.ne.s32.totalorder %s162, %s165
    %p171 = scmp.eq.s32.totalorder %s21, 0
    %p172 = por %p170, %p171
    %p173 = scmp.ne.s32.totalorder %s162, %s165
    %p174 = scmp.eq.s32.totalorder %s26, 2
    %p175 = por %p173, %p174
    %p176 = scmp.ne.s32.totalorder %s165, %s166
    %p177 = scmp.eq.s32.totalorder %s26, 0
    %p178 = por %p176, %p177
    %p179 = scmp.ne.s32.totalorder %s165, %s166
    %p180 = scmp.eq.s32.totalorder %s27, 2
    %p181 = por %p179, %p180
    %p183 = scmp.ne.s32.totalorder %s166, %s182
    %p184 = scmp.eq.s32.totalorder %s27, 0
    %p185 = por %p183, %p184
    %s186 = ssub.s32 %s29, %s43
    %s187 = ssub.s32 %s30, %s39
    %s188 = sor.u32 %s186, %s187
    %p189 = scmp.eq.s32.totalorder %s188, 0
    %s191 = sadd.s32 %s190, 1
    %s192 = scalar_select %p189, %s190, %s191
    %p195 = pneg %p189
    %p196 = scmp.eq.s32.totalorder %s21, 2
    %p197 = por %p195, %p196
    %p198 = scmp.ne.s32.totalorder %s190, %s193
    %p199 = scmp.eq.s32.totalorder %s21, 0
    %p200 = por %p198, %p199
    %p201 = scmp.ne.s32.totalorder %s190, %s193
    %p202 = scmp.eq.s32.totalorder %s26, 2
    %p203 = por %p201, %p202
    %p204 = scmp.ne.s32.totalorder %s193, %s194
    %p205 = scmp.eq.s32.totalorder %s26, 0
    %p206 = por %p204, %p205
    %p207 = scmp.ne.s32.totalorder %s193, %s194
    %p208 = scmp.eq.s32.totalorder %s27, 2
    %p209 = por %p207, %p208
    %p211 = scmp.ne.s32.totalorder %s194, %s210
    %p212 = scmp.eq.s32.totalorder %s27, 0
    %p213 = por %p211, %p212
    %s214 = ssub.s32 %s29, %s43
    %s215 = ssub.s32 %s28, %s47
    %s216 = sor.u32 %s214, %s215
    %p217 = scmp.eq.s32.totalorder %s216, 0
    %s219 = sadd.s32 %s218, 1
    %s220 = scalar_select %p217, %s218, %s219
    %p223 = pneg %p217
    %p224 = scmp.eq.s32.totalorder %s21, 2
    %p225 = por %p223, %p224
    %p226 = scmp.ne.s32.totalorder %s218, %s221
    %p227 = scmp.eq.s32.totalorder %s21, 0
    %p228 = por %p226, %p227
    %p229 = scmp.ne.s32.totalorder %s218, %s221
    %p230 = scmp.eq.s32.totalorder %s26, 2
    %p231 = por %p229, %p230
    %p232 = scmp.ne.s32.totalorder %s221, %s222
    %p233 = scmp.eq.s32.totalorder %s26, 0
    %p234 = por %p232, %p233
    %p235 = scmp.ne.s32.totalorder %s221, %s222
    %p236 = scmp.eq.s32.totalorder %s27, 2
    %p237 = por %p235, %p236
    %p239 = scmp.ne.s32.totalorder %s222, %s238
    %p240 = scmp.eq.s32.totalorder %s27, 0
    %p241 = por %p239, %p240
    %s242 = ssub.s32 %s28, %s47
    %p243 = scmp.eq.s32.totalorder %s242, 0
    %s245 = sadd.s32 %s244, 1
    %s246 = scalar_select %p243, %s244, %s245
    %p249 = pneg %p243
    %p250 = scmp.eq.s32.totalorder %s21, 2
    %p251 = por %p249, %p250
    %p252 = scmp.ne.s32.totalorder %s244, %s247
    %p253 = scmp.eq.s32.totalorder %s21, 0
    %p254 = por %p252, %p253
    %p255 = scmp.ne.s32.totalorder %s244, %s247
    %p256 = scmp.eq.s32.totalorder %s26, 2
    %p257 = por %p255, %p256
    %p258 = scmp.ne.s32.totalorder %s247, %s248
    %p259 = scmp.eq.s32.totalorder %s26, 0
    %p260 = por %p258, %p259
    %p261 = scmp.ne.s32.totalorder %s247, %s248
    %p262 = scmp.eq.s32.totalorder %s27, 2
    %p263 = por %p261, %p262
    %p265 = scmp.ne.s32.totalorder %s248, %s264
    %p266 = scmp.eq.s32.totalorder %s27, 0
    %p267 = por %p265, %p266
    %s268 = ssub.s32 %s28, %s47
    %p269 = scmp.eq.s32.totalorder %s268, 0
    %s271 = sadd.s32 %s270, 1
    %s272 = scalar_select %p269, %s270, %s271
    %p275 = pneg %p269
    %p276 = scmp.eq.s32.totalorder %s21, 2
    %p277 = por %p275, %p276
    %p278 = scmp.ne.s32.totalorder %s270, %s273
    %p279 = scmp.eq.s32.totalorder %s21, 0
    %p280 = por %p278, %p279
    %p281 = scmp.ne.s32.totalorder %s270, %s273
    %p282 = scmp.eq.s32.totalorder %s26, 2
    %p283 = por %p281, %p282
    %p284 = scmp.ne.s32.totalorder %s273, %s274
    %p285 = scmp.eq.s32.totalorder %s26, 0
    %p286 = por %p284, %p285
    %p287 = scmp.ne.s32.totalorder %s273, %s274
    %p288 = scmp.eq.s32.totalorder %s27, 2
    %p289 = por %p287, %p288
    %p291 = scmp.ne.s32.totalorder %s274, %s290
    %p292 = scmp.eq.s32.totalorder %s27, 0
    %p293 = por %p291, %p292
    %p294 = scmp.le.s32.totalorder 1, %s21
    %p295 = scmp.lt.s32.totalorder %s21, 4
    %p296 = pnand %p294, %p295
    %p297 = pneg %p296
    // Predicated region
    $region9: #{cgcn_forward.10} parent=5 // pred_check
      _
    $region10: #{cgcn_forward.10} parent=5 // pred_check_branch
      %299 = sbr.rel (%p296) target = $region12
    $region11: #{cgcn_forward.10} parent=5 // pred_region
      %s300 = ssub.s32 %s21, 1
      // Predicated region
      $region13: #{cgcn_forward.10} parent=11 // pred_check
        %p301 = pneg %p96
      $region14: #{cgcn_forward.10} parent=11 // pred_check_branch
        %303 = sbr.rel (%p301) target = $region16
      $region15: #{cgcn_forward.10} parent=11 // pred_region
        %s304 = smul.u32 2, %s33
        %p305 = scmp.lt.s32.totalorder %s304, 1
        %s306 = scalar_select %p305, %s304, 1
        %s307 = smul.addr %s306, 8
        %s308 = scalar_lea.vmem %s2, %s307
        %s309 = smul.u32 2, %s33
      $region16: #{cgcn_forward.10} parent=11 // pred_fallthru
        _
      // Predicated region
      $region17: #{cgcn_forward.10} parent=11 // pred_check
        %p310 = pneg %p122
      $region18: #{cgcn_forward.10} parent=11 // pred_check_branch
        %312 = sbr.rel (%p310) target = $region20
      $region19: #{cgcn_forward.10} parent=11 // pred_region
        %s313 = smul.u32 2, %s31
        %p314 = scmp.lt.s32.totalorder %s313, 1
        %s315 = scalar_select %p314, %s313, 1
        %s316 = smul.addr %s315, 8
        %s317 = scalar_lea.vmem %s3, %s316
        %s318 = smul.u32 2, %s31
      $region20: #{cgcn_forward.10} parent=11 // pred_fallthru
        _
      // Predicated region
      $region21: #{cgcn_forward.10} parent=11 // pred_check
        %p319 = pneg %p260
      $region22: #{cgcn_forward.10} parent=11 // pred_check_branch
        %321 = sbr.rel (%p319) target = $region24
      $region23: #{cgcn_forward.10} parent=11 // pred_region
        %s322 = smul.u32 2, %s31
        %p323 = scmp.lt.s32.totalorder %s322, 1
        %s324 = scalar_select %p323, %s322, 1
        %s325 = smul.addr %s324, 8
        %s326 = scalar_lea.vmem %s8, %s325
        %s327 = smul.u32 2, %s31
      $region24: #{cgcn_forward.10} parent=11 // pred_fallthru
        _
    $region12: #{cgcn_forward.10} parent=5 // pred_fallthru
      _
    %p328 = scmp.lt.s32.totalorder %s21, 3
    // Predicated region
    $region25: #{cgcn_forward.10} parent=5 // pred_check
      %p329 = pneg %p328
    $region26: #{cgcn_forward.10} parent=5 // pred_check_branch
      %331 = sbr.rel (%p329) target = $region28
    $region27: #{cgcn_forward.10} parent=5 // pred_region
      // Predicated region
      $region29: #{cgcn_forward.10} parent=27 // pred_check
        %p332 = pneg %p64
      $region30: #{cgcn_forward.10} parent=27 // pred_check_branch
        %334 = sbr.rel (%p332) target = $region32
      $region31: #{cgcn_forward.10} parent=27 // pred_region
        %s335 = smul.u32 2, %s30
        %p336 = scmp.lt.s32.totalorder %s29, 2
        %s337 = scalar_select %p336, %s29, 2
        %p338 = scmp.lt.s32.totalorder %s335, 1
        %s339 = scalar_select %p338, %s335, 1
        %p340 = scmp.lt.s32.totalorder %s28, 0
        %s341 = scalar_select %p340, %s28, 0
        %s342 = sadd.s32 %s341, %s339
        %s343 = smul.addr %s337, 2
        %s344 = sadd.s32 %s342, %s343
        %s345 = smul.addr %s344, 2
        %s346 = scalar_lea.vmem %s1, %s345
        %s347 = smul.u32 2, %s30
      $region32: #{cgcn_forward.10} parent=27 // pred_fallthru
        _
      // Predicated region
      $region33: #{cgcn_forward.10} parent=27 // pred_check
        %p348 = pneg %p144
      $region34: #{cgcn_forward.10} parent=27 // pred_check_branch
        %350 = sbr.rel (%p348) target = $region36
      $region35: #{cgcn_forward.10} parent=27 // pred_region
        %s351 = smul.u32 2, %s30
        %p352 = scmp.lt.s32.totalorder %s29, 2
        %s353 = scalar_select %p352, %s29, 2
        %p354 = scmp.lt.s32.totalorder %s351, 1
        %s355 = scalar_select %p354, %s351, 1
        %s356 = smul.addr %s353, 2
        %s357 = sadd.s32 %s355, %s356
        %s358 = smul.addr %s357, 8
        %s359 = scalar_lea.vmem %s4, %s358
        %s360 = smul.u32 2, %s30
      $region36: #{cgcn_forward.10} parent=27 // pred_fallthru
        _
      // Predicated region
      $region37: #{cgcn_forward.10} parent=27 // pred_check
        %p361 = pneg %p172
      $region38: #{cgcn_forward.10} parent=27 // pred_check_branch
        %363 = sbr.rel (%p361) target = $region40
      $region39: #{cgcn_forward.10} parent=27 // pred_region
        %s364 = smul.u32 2, %s28
        %p365 = scmp.lt.s32.totalorder %s29, 2
        %s366 = scalar_select %p365, %s29, 2
        %p367 = scmp.lt.s32.totalorder %s364, 1
        %s368 = scalar_select %p367, %s364, 1
        %s369 = smul.addr %s366, 2
        %s370 = sadd.s32 %s368, %s369
        %s371 = smul.addr %s370, 8
        %s372 = scalar_lea.vmem %s5, %s371
        %s373 = smul.u32 2, %s28
      $region40: #{cgcn_forward.10} parent=27 // pred_fallthru
        _
      // Predicated region
      $region41: #{cgcn_forward.10} parent=27 // pred_check
        %p374 = pneg %p200
      $region42: #{cgcn_forward.10} parent=27 // pred_check_branch
        %376 = sbr.rel (%p374) target = $region44
      $region43: #{cgcn_forward.10} parent=27 // pred_region
        %s377 = smul.u32 2, %s30
        %p378 = scmp.lt.s32.totalorder %s29, 2
        %s379 = scalar_select %p378, %s29, 2
        %p380 = scmp.lt.s32.totalorder %s377, 1
        %s381 = scalar_select %p380, %s377, 1
        %s382 = smul.addr %s379, 2
        %s383 = sadd.s32 %s381, %s382
        %s384 = smul.addr %s383, 8
        %s385 = scalar_lea.vmem %s6, %s384
        %s386 = smul.u32 2, %s30
      $region44: #{cgcn_forward.10} parent=27 // pred_fallthru
        _
      // Predicated region
      $region45: #{cgcn_forward.10} parent=27 // pred_check
        %p387 = pneg %p228
      $region46: #{cgcn_forward.10} parent=27 // pred_check_branch
        %389 = sbr.rel (%p387) target = $region48
      $region47: #{cgcn_forward.10} parent=27 // pred_region
        %p390 = scmp.lt.s32.totalorder %s29, 2
        %s391 = scalar_select %p390, %s29, 2
        %p392 = scmp.lt.s32.totalorder %s28, 0
        %s393 = scalar_select %p392, %s28, 0
        %s394 = sadd.s32 %s393, %s391
        %s395 = scalar_lea.vmem %s7, %s394
      $region48: #{cgcn_forward.10} parent=27 // pred_fallthru
        _
    $region28: #{cgcn_forward.10} parent=5 // pred_fallthru
      _
    %p396 = scmp.le.s32.totalorder 1, %s21
    %p397 = scmp.lt.s32.totalorder %s21, 4
    %p398 = pnand %p396, %p397
    %p399 = pneg %p398
    // Predicated region
    $region49: #{cgcn_forward.10} parent=5 // pred_check
      _
    $region50: #{cgcn_forward.10} parent=5 // pred_check_branch
      %401 = sbr.rel (%p398) target = $region52
    $region51: #{cgcn_forward.10} parent=5 // pred_region
      %s402 = ssub.s32 %s21, 1
      %s403 = smul.u32 2, %s33
      %p404 = scmp.lt.s32.totalorder %s32, 2
      %s405 = scalar_select %p404, %s32, 2
      %p406 = scmp.lt.s32.totalorder %s403, 1
      %s407 = scalar_select %p406, %s403, 1
      %p408 = scmp.lt.s32.totalorder %s31, 0
      %s409 = scalar_select %p408, %s31, 0
      %s410 = sadd.s32 %s409, %s407
      %s411 = smul.addr %s405, 2
      %s412 = sadd.s32 %s410, %s411
      %s413 = smul.addr %s412, 2
      %s414 = scalar_lea.vmem %s1, %s413
      %p415 = pneg %p70
      %p416 = pneg %p67
      %s417 = smul.u32 2, %s33
      %p418 = scmp.lt.s32.totalorder %s417, 1
      %s419 = scalar_select %p418, %s417, 1
      %s420 = smul.addr %s419, 8
      %s421 = scalar_lea.vmem %s2, %s420
      %p422 = pneg %p96
      %p423 = pneg %p93
      %s424 = smul.u32 2, %s31
      %p425 = scmp.lt.s32.totalorder %s424, 1
      %s426 = scalar_select %p425, %s424, 1
      %s427 = smul.addr %s426, 8
      %s428 = scalar_lea.vmem %s3, %s427
      %p429 = pneg %p122
      %p430 = pneg %p119
      %s431 = smul.u32 2, %s33
      %p432 = scmp.lt.s32.totalorder %s32, 2
      %s433 = scalar_select %p432, %s32, 2
      %p434 = scmp.lt.s32.totalorder %s431, 1
      %s435 = scalar_select %p434, %s431, 1
      %s436 = smul.addr %s433, 2
      %s437 = sadd.s32 %s435, %s436
      %s438 = smul.addr %s437, 8
      %s439 = scalar_lea.vmem %s4, %s438
      %p440 = pneg %p150
      %p441 = pneg %p147
      %s442 = smul.u32 2, %s31
      %p443 = scmp.lt.s32.totalorder %s32, 2
      %s444 = scalar_select %p443, %s32, 2
      %p445 = scmp.lt.s32.totalorder %s442, 1
      %s446 = scalar_select %p445, %s442, 1
      %s447 = smul.addr %s444, 2
      %s448 = sadd.s32 %s446, %s447
      %s449 = smul.addr %s448, 8
      %s450 = scalar_lea.vmem %s5, %s449
      %p451 = pneg %p178
      %p452 = pneg %p175
      %s453 = smul.u32 2, %s33
      %p454 = scmp.lt.s32.totalorder %s32, 2
      %s455 = scalar_select %p454, %s32, 2
      %p456 = scmp.lt.s32.totalorder %s453, 1
      %s457 = scalar_select %p456, %s453, 1
      %s458 = smul.addr %s455, 2
      %s459 = sadd.s32 %s457, %s458
      %s460 = smul.addr %s459, 8
      %s461 = scalar_lea.vmem %s6, %s460
      %p462 = pneg %p206
      %p463 = pneg %p203
      %p464 = scmp.lt.s32.totalorder %s32, 2
      %s465 = scalar_select %p464, %s32, 2
      %p466 = scmp.lt.s32.totalorder %s31, 0
      %s467 = scalar_select %p466, %s31, 0
      %s468 = sadd.s32 %s467, %s465
      %s469 = scalar_lea.vmem %s7, %s468
      %p470 = pneg %p234
      %p471 = pneg %p231
      %s472 = smul.u32 2, %s31
      %p473 = scmp.lt.s32.totalorder %s472, 1
      %s474 = scalar_select %p473, %s472, 1
      %s475 = smul.addr %s474, 8
      %s476 = scalar_lea.vmem %s8, %s475
      %p477 = pneg %p260
      %p478 = pneg %p257
      %p479 = pneg %p286
      %p480 = pneg %p283
      %s481 = smul.u32 2, %s31
      %p482 = scmp.lt.s32.totalorder %s481, 1
      %s483 = scalar_select %p482, %s481, 1
      %s484 = smul.addr %s483, 8
      %s485 = scalar_lea.vmem %s9, %s484
      %s486 = smul.u32 2, %s33
      %p487 = scmp.lt.s32.totalorder %s32, 2
      %s488 = scalar_select %p487, %s32, 2
      %p489 = scmp.lt.s32.totalorder %s486, 1
      %s490 = scalar_select %p489, %s486, 1
      %p491 = scmp.lt.s32.totalorder %s31, 0
      %s492 = scalar_select %p491, %s31, 0
      %s493 = sadd.s32 %s492, %s490
      %s494 = smul.addr %s488, 2
      %s495 = sadd.s32 %s493, %s494
      %s496 = smul.addr %s495, 2
      %s497 = scalar_lea.vmem %s1, %s496
      %s498 = smul.u32 2, %s33
      %s499 = smul.u32 2, %s33
      %p500 = scmp.lt.s32.totalorder %s499, 1
      %s501 = scalar_select %p500, %s499, 1
      %s502 = smul.addr %s501, 8
      %s503 = scalar_lea.vmem %s2, %s502
      %s504 = smul.u32 2, %s33
      %s505 = smul.u32 2, %s31
      %p506 = scmp.lt.s32.totalorder %s505, 1
      %s507 = scalar_select %p506, %s505, 1
      %s508 = smul.addr %s507, 8
      %s509 = scalar_lea.vmem %s3, %s508
      %s510 = smul.u32 2, %s31
      %s511 = smul.u32 2, %s33
      %p512 = scmp.lt.s32.totalorder %s32, 2
      %s513 = scalar_select %p512, %s32, 2
      %p514 = scmp.lt.s32.totalorder %s511, 1
      %s515 = scalar_select %p514, %s511, 1
      %s516 = smul.addr %s513, 2
      %s517 = sadd.s32 %s515, %s516
      %s518 = smul.addr %s517, 8
      %s519 = scalar_lea.vmem %s4, %s518
      %s520 = smul.u32 2, %s33
      %s521 = smul.u32 2, %s31
      %p522 = scmp.lt.s32.totalorder %s32, 2
      %s523 = scalar_select %p522, %s32, 2
      %p524 = scmp.lt.s32.totalorder %s521, 1
      %s525 = scalar_select %p524, %s521, 1
      %s526 = smul.addr %s523, 2
      %s527 = sadd.s32 %s525, %s526
      %s528 = smul.addr %s527, 8
      %s529 = scalar_lea.vmem %s5, %s528
      %s530 = smul.u32 2, %s31
      %s531 = smul.u32 2, %s33
      %p532 = scmp.lt.s32.totalorder %s32, 2
      %s533 = scalar_select %p532, %s32, 2
      %p534 = scmp.lt.s32.totalorder %s531, 1
      %s535 = scalar_select %p534, %s531, 1
      %s536 = smul.addr %s533, 2
      %s537 = sadd.s32 %s535, %s536
      %s538 = smul.addr %s537, 8
      %s539 = scalar_lea.vmem %s6, %s538
      %s540 = smul.u32 2, %s33
      %p541 = scmp.lt.s32.totalorder %s32, 2
      %s542 = scalar_select %p541, %s32, 2
      %p543 = scmp.lt.s32.totalorder %s31, 0
      %s544 = scalar_select %p543, %s31, 0
      %s545 = sadd.s32 %s544, %s542
      %s546 = scalar_lea.vmem %s7, %s545
      %s547 = smul.u32 2, %s31
      %p548 = scmp.lt.s32.totalorder %s547, 1
      %s549 = scalar_select %p548, %s547, 1
      %s550 = smul.addr %s549, 8
      %s551 = scalar_lea.vmem %s8, %s550
      %s552 = smul.u32 2, %s31
      %s553 = smul.u32 2, %s31
      %p554 = scmp.lt.s32.totalorder %s553, 1
      %s555 = scalar_select %p554, %s553, 1
      %s556 = smul.addr %s555, 8
      %s557 = scalar_lea.vmem %s9, %s556
      %s558 = smul.u32 2, %s31
      %p562 = scmp.eq.s32.totalorder %s32, 0
      %p563 = scmp.eq.s32.totalorder %s33, 0
      %p564 = pnand %p562, %p563
      %p565 = pneg %p564
      // Predicated region
      $region53: #{cgcn_forward.10} parent=51 // pred_check
        _
      $region54: #{cgcn_forward.10} parent=51 // pred_check_branch
        %567 = sbr.rel (%p564) target = $region56
      $region55: #{cgcn_forward.10} parent=51 // pred_region
        %568 = vst [vmem:[#allocation2] sm:$0xff] 0.0
        %569 = vst [vmem:[#allocation2 + $0x8] sm:$0xff] 0.0
      $region56: #{cgcn_forward.10} parent=51 // pred_fallthru
        _
      %v570 = vld [vmem:[%s497] sm:$0x3]
      %v571 = vld [vmem:[%s497 + $0x2] sm:$0x3]
      %v572 = vld [vmem:[%s503] sm:$0xff]
      %v573 = vld [vmem:[%s503 + $0x8] sm:$0xff]
      %v574 = vld [vmem:[%s509] sm:$0xff]
      %v575 = vld [vmem:[%s509 + $0x8] sm:$0xff]
      %v576 = vld [vmem:[%s519] sm:$0xff]
      %v577 = vld [vmem:[%s519 + $0x8] sm:$0xff]
      %579 = vset.pattern.permute.xlu0 0
      %580 = vperm.xlu0 %579, %v576
      %v581 = vpop.permute.xlu0 %580
      %584 = vset.pattern.permute.xlu0 0
      %585 = vperm.xlu0 %584, %v577
      %v586 = vpop.permute.xlu0 %585
      %v588 = vmul.f32 %v572, %v581
      %v589 = vmul.f32 %v573, %v586
      %v590 = vpack.c.bf16 %v589, %v588
      %v591 = vld [vmem:[%s529] sm:$0xff]
      %v592 = vld [vmem:[%s529 + $0x8] sm:$0xff]
      %594 = vset.pattern.permute.xlu0 0
      %595 = vperm.xlu0 %594, %v591
      %v596 = vpop.permute.xlu0 %595
      %599 = vset.pattern.permute.xlu0 0
      %600 = vperm.xlu0 %599, %v592
      %v601 = vpop.permute.xlu0 %600
      %v603 = vmul.f32 %v574, %v596
      %v604 = vmul.f32 %v575, %v601
      %v605 = vpack.c.bf16 %v604, %v603
      %v606 = vunpack.c.l.bf16 %v590
      %v607 = vunpack.c.h.bf16 %v590
      %v608 = vunpack.c.l.bf16 %v605
      %v609 = vunpack.c.h.bf16 %v605
      %v610 = vmul.f32 %v606, %v606
      %v611 = vmul.f32 %v607, %v607
      %612 = vadd.xlane.f32.xlu0 %v610
      %v613 = vpop.xlane.xlu0 %612
      %614 = vadd.xlane.f32.xlu0 %v611
      %v615 = vpop.xlane.xlu0 %614
      %v616 = vmul.f32 %v608, %v608
      %v617 = vmul.f32 %v609, %v609
      %618 = vadd.xlane.f32.xlu0 %v616
      %v619 = vpop.xlane.xlu0 %618
      %620 = vadd.xlane.f32.xlu0 %v617
      %v621 = vpop.xlane.xlu0 %620
      %622 = vmatprep.subr.bf16.mxu0 0
      %623 = vmatpush1.bf16.xpose.msra.mxu0 %v605
      %624 = vmatprep.subr.bf16.mxu0 0
      %625 = vmatpush1.bf16.xpose.msra.mxu0 0
      %626 = vmatprep.subr.bf16.mxu0 0
      %627 = vmatpush1.bf16.xpose.msra.mxu0 0
      %628 = vmatprep.subr.bf16.mxu0 0
      %629 = vmatpush1.bf16.xpose.msra.mxu0 0
      %630 = vmatprep.subr.bf16.mxu0 0
      %631 = vmatpush1.bf16.xpose.msra.mxu0 0
      %632 = vmatprep.subr.bf16.mxu0 0
      %633 = vmatpush1.bf16.xpose.msra.mxu0 0
      %634 = vmatprep.subr.bf16.mxu0 0
      %635 = vmatpush1.bf16.xpose.msra.mxu0 0
      %636 = vmatprep.subr.bf16.mxu0 0
      %637 = vmatpush1.bf16.xpose.msra.mxu0 0
      %638 = vmatprep.subr.bf16.mxu0 0
      %639 = vmatpush1.bf16.xpose.msra.mxu0 0
      %640 = vmatprep.subr.bf16.mxu0 0
      %641 = vmatpush1.bf16.xpose.msra.mxu0 0
      %642 = vmatprep.subr.bf16.mxu0 0
      %643 = vmatpush1.bf16.xpose.msra.mxu0 0
      %644 = vmatprep.subr.bf16.mxu0 0
      %645 = vmatpush1.bf16.xpose.msra.mxu0 0
      %646 = vmatprep.subr.bf16.mxu0 0
      %647 = vmatpush1.bf16.xpose.msra.mxu0 0
      %648 = vmatprep.subr.bf16.mxu0 0
      %649 = vmatpush1.bf16.xpose.msra.mxu0 0
      %650 = vmatprep.subr.bf16.mxu0 0
      %651 = vmatpush1.bf16.xpose.msra.mxu0 0
      %652 = vmatprep.subr.bf16.mxu0 0
      %653 = vmatpush1.bf16.xpose.msra.mxu0 0
      %654 = vmatprep.mubr.bf16.mxu0 0
      %655 = vmatmul.mubr.bf16.gmra.mrb[0].mxu0 %v590
      %v656 = vpop.f32.mrb[0].mxu0
      %v657 = vadd.f32 0.0, %v656
      %v658 = vpop.f32.mrb[0].mxu0
      %v659 = vpop.f32.mrb[0].mxu0
      %v660 = vadd.f32 0.0, %v659
      %v661 = vpop.f32.mrb[0].mxu0
      %662 = vdwg.mxu0
      %663 = vxpose.xlu0.b32.start [1/16] %v619, 128
      %664 = vxpose.xlu0.b32.cont [2/16] %v621, 128
      %665 = vxpose.xlu0.b32.cont [3/16] 0.0, 128
      %666 = vxpose.xlu0.b32.cont [4/16] 0.0, 128
      %667 = vxpose.xlu0.b32.cont [5/16] 0.0, 128
      %668 = vxpose.xlu0.b32.cont [6/16] 0.0, 128
      %669 = vxpose.xlu0.b32.cont [7/16] 0.0, 128
      %670 = vxpose.xlu0.b32.cont [8/16] 0.0, 128
      %671 = vxpose.xlu0.b32.cont [9/16] 0.0, 128
      %672 = vxpose.xlu0.b32.cont [10/16] 0.0, 128
      %673 = vxpose.xlu0.b32.cont [11/16] 0.0, 128
      %674 = vxpose.xlu0.b32.cont [12/16] 0.0, 128
      %675 = vxpose.xlu0.b32.cont [13/16] 0.0, 128
      %676 = vxpose.xlu0.b32.cont [14/16] 0.0, 128
      %677 = vxpose.xlu0.b32.cont [15/16] 0.0, 128
      %678 = vxpose.xlu0.b32.end [16/16] 0.0, 128
      %v679 = vpop.trf.xlu0
      %v680 = vpop.trf.xlu0
      %v681 = vpop.trf.xlu0
      %v682 = vpop.trf.xlu0
      %v683 = vpop.trf.xlu0
      %v684 = vpop.trf.xlu0
      %v685 = vpop.trf.xlu0
      %v686 = vpop.trf.xlu0
      %v687 = vpop.trf.xlu0
      %v688 = vpop.trf.xlu0
      %v689 = vpop.trf.xlu0
      %v690 = vpop.trf.xlu0
      %v691 = vpop.trf.xlu0
      %v692 = vpop.trf.xlu0
      %v693 = vpop.trf.xlu0
      %v694 = vpop.trf.xlu0
      %v695 = vlaneseq
      %v696 = vshrl.u32 %v695, 7
      %v697 = vsub.s32 0, %v696
      %v698 = vrot.slane %v679, %v697
      %v699 = vadd.f32 %v613, %v698
      %v700 = vadd.f32 %v615, %v698
      %v701 = vmul.f32 %v657, 2.0
      %v702 = vmul.f32 %v660, 2.0
      %v703 = vsub.f32 %v699, %v701
      %v704 = vsub.f32 %v700, %v702
      %v705 = vmax.f32 %v703, 0.0
      %v706 = vmax.f32 %v704, 0.0
      %v707 = vadd.f32 %v705, 0.0001
      %v708 = vadd.f32 %v706, 0.0001
      %v709 = vrsqrt.pop %v707
      %v710 = vrsqrt.pop %v708
      %v711 = vtanh.pop %v709
      %v712 = vtanh.pop %v710
      %v713 = vld [vmem:[%s539] sm:$0xff]
      %v714 = vld [vmem:[%s539 + $0x8] sm:$0xff]
      %716 = vset.pattern.permute.xlu0 0
      %717 = vperm.xlu0 %716, %v713
      %v718 = vpop.permute.xlu0 %717
      %721 = vset.pattern.permute.xlu0 0
      %722 = vperm.xlu0 %721, %v714
      %v723 = vpop.permute.xlu0 %722
      %v725 = vmul.f32 %v711, %v718
      %v726 = vmul.f32 %v712, %v723
      %v727 = vld [vmem:[%s546] sm:$0x1]
      %v729 = vlaneseq
      %v730 = vshrl.u32 %v729, 7
      %v731 = vsub.s32 0, %v730
      %v732 = vrot.slane %v727, %v731
      %v734 = vmul.f32 %v725, %v732
      %v735 = vmul.f32 %v726, %v732
      %vm736 = vnez %v570
      %vm737 = vnez %v571
      %v738 = vsel %vm736, 16843009, 0
      %v739 = vsel %vm737, 16843009, 0
      %v740 = vunpack.c.0.s8 %v738
      %v741 = vunpack.c.0.s8 %v739
      %vm742 = vcmp.ne.s32.totalorder %v740, 0
      %vm743 = vcmp.ne.s32.totalorder %v741, 0
      %v744 = vsel %vm742, %v734, 0.0
      %v745 = vsel %vm743, %v735, 0.0
      %v746 = vpack.c.bf16 %v745, %v744
      %v747 = vpack.c.bf16 %v573, %v572
      %748 = vxpose.xlu0.c.b16.start [1/8] %v746, 128
      %749 = vxpose.xlu0.c.b16.cont [2/8] 0, 128
      %750 = vxpose.xlu0.c.b16.cont [3/8] 0, 128
      %751 = vxpose.xlu0.c.b16.cont [4/8] 0, 128
      %752 = vxpose.xlu0.c.b16.cont [5/8] 0, 128
      %753 = vxpose.xlu0.c.b16.cont [6/8] 0, 128
      %754 = vxpose.xlu0.c.b16.cont [7/8] 0, 128
      %755 = vxpose.xlu0.c.b16.end [8/8] 0, 128
      %v756 = vpop.trf.xlu0
      %v757 = vpop.trf.xlu0
      %v758 = vpop.trf.xlu0
      %v759 = vpop.trf.xlu0
      %v760 = vpop.trf.xlu0
      %v761 = vpop.trf.xlu0
      %v762 = vpop.trf.xlu0
      %v763 = vpop.trf.xlu0
      %vm764 = vcmask 130048
      %v766 = vsel %vm764, %v756, 0
      %768 = vmatprep.subr.bf16.mxu0 0
      %769 = vmatpush1.bf16.msra.mxu0 %v747
      %770 = vmatprep.subr.bf16.mxu0 0
      %771 = vmatpush1.bf16.msra.mxu0 0
      %772 = vmatprep.subr.bf16.mxu0 0
      %773 = vmatpush1.bf16.msra.mxu0 0
      %774 = vmatprep.subr.bf16.mxu0 0
      %775 = vmatpush1.bf16.msra.mxu0 0
      %776 = vmatprep.subr.bf16.mxu0 0
      %777 = vmatpush1.bf16.msra.mxu0 0
      %778 = vmatprep.subr.bf16.mxu0 0
      %779 = vmatpush1.bf16.msra.mxu0 0
      %780 = vmatprep.subr.bf16.mxu0 0
      %781 = vmatpush1.bf16.msra.mxu0 0
      %782 = vmatprep.subr.bf16.mxu0 0
      %783 = vmatpush1.bf16.msra.mxu0 0
      %784 = vmatprep.subr.bf16.mxu0 0
      %785 = vmatpush1.bf16.msra.mxu0 0
      %786 = vmatprep.subr.bf16.mxu0 0
      %787 = vmatpush1.bf16.msra.mxu0 0
      %788 = vmatprep.subr.bf16.mxu0 0
      %789 = vmatpush1.bf16.msra.mxu0 0
      %790 = vmatprep.subr.bf16.mxu0 0
      %791 = vmatpush1.bf16.msra.mxu0 0
      %792 = vmatprep.subr.bf16.mxu0 0
      %793 = vmatpush1.bf16.msra.mxu0 0
      %794 = vmatprep.subr.bf16.mxu0 0
      %795 = vmatpush1.bf16.msra.mxu0 0
      %796 = vmatprep.subr.bf16.mxu0 0
      %797 = vmatpush1.bf16.msra.mxu0 0
      %798 = vmatprep.subr.bf16.mxu0 0
      %799 = vmatpush1.bf16.msra.mxu0 0
      %800 = vmatprep.mubr.bf16.mxu0 0
      %801 = vmatmul.mubr.bf16.gmra.mrb[0].mxu0 %v766
      %v802 = vpop.f32.mrb[0].mxu0
      %v803 = vadd.f32 0.0, %v802
      %v804 = vpop.f32.mrb[0].mxu0
      %v805 = vpop.f32.mrb[0].mxu0
      %v806 = vadd.f32 0.0, %v805
      %v807 = vpop.f32.mrb[0].mxu0
      %808 = vdwg.mxu0
      %v809 = vld [vmem:[#allocation2] sm:$0xff]
      %v810 = vld [vmem:[#allocation2 + $0x8] sm:$0xff]
      %s811 = sld [smem:[#allocation4 + %s32]]
      %v812 = vstv %s811
      %v813 = vmul.f32 %v812, %v803
      %v814 = vmul.f32 %v812, %v806
      %v815 = vadd.f32 %v809, %v813
      %v816 = vadd.f32 %v810, %v814
      %817 = vst [vmem:[#allocation2] sm:$0xff] %v815
      %818 = vst [vmem:[#allocation2 + $0x8] sm:$0xff] %v816
      %p819 = scmp.eq.s32.totalorder %s32, 2
      %p820 = pnand %p819, %p563
      %p821 = pneg %p820
      // Predicated region
      $region57: #{cgcn_forward.10} parent=51 // pred_check
        _
      $region58: #{cgcn_forward.10} parent=51 // pred_check_branch
        %823 = sbr.rel (%p820) target = $region60
      $region59: #{cgcn_forward.10} parent=51 // pred_region
        %v824 = vld [vmem:[%s551] sm:$0xff]
        %v825 = vld [vmem:[%s551 + $0x8] sm:$0xff]
        %v826 = vmul.f32 %v824, 0.1
        %v827 = vmul.f32 %v825, 0.1
        %v828 = vld [vmem:[#allocation2] sm:$0xff]
        %v829 = vld [vmem:[#allocation2 + $0x8] sm:$0xff]
        %v830 = vmul.f32 %v828, 0.9
        %v831 = vmul.f32 %v829, 0.9
        %v832 = vadd.f32 %v826, %v830
        %v833 = vadd.f32 %v827, %v831
        %834 = vst [vmem:[%s557] sm:$0xff] %v832
        %835 = vst [vmem:[%s557 + $0x8] sm:$0xff] %v833
      $region60: #{cgcn_forward.10} parent=51 // pred_fallthru
        _
      %s836 = smul.u32 2, %s31
      %p837 = scmp.lt.s32.totalorder %s836, 1
      %s838 = scalar_select %p837, %s836, 1
      %s839 = smul.addr %s838, 8
      %s840 = scalar_lea.vmem %s9, %s839
      // Predicated region
      $region61: #{cgcn_forward.10} parent=51 // pred_check
        %p841 = pneg %p283
      $region62: #{cgcn_forward.10} parent=51 // pred_check_branch
        %843 = sbr.rel (%p841) target = $region64
      $region63: #{cgcn_forward.10} parent=51 // pred_region
        %s844 = smul.u32 2, %s31
      $region64: #{cgcn_forward.10} parent=51 // pred_fallthru
        _
      // Predicated region
      $region65: #{cgcn_forward.10} parent=51 // pred_check
        %p845 = pneg %p283
      $region66: #{cgcn_forward.10} parent=51 // pred_check_branch
        %847 = sbr.rel (%p845) target = $region68
      $region67: #{cgcn_forward.10} parent=51 // pred_region
        %s848 = smul.u32 2, %s31
        %p849 = scmp.lt.s32.totalorder %s848, 1
        %s850 = scalar_select %p849, %s848, 1
        %s851 = smul.addr %s850, 8
        %s852 = scalar_lea.vmem %s9, %s851
      $region68: #{cgcn_forward.10} parent=51 // pred_fallthru
        _
    $region52: #{cgcn_forward.10} parent=5 // pred_fallthru
      _
    %p853 = scmp.le.s32.totalorder 2, %s21
    // Predicated region
    $region69: #{cgcn_forward.10} parent=5 // pred_check
      %p854 = pneg %p853
    $region70: #{cgcn_forward.10} parent=5 // pred_check_branch
      %856 = sbr.rel (%p854) target = $region72
    $region71: #{cgcn_forward.10} parent=5 // pred_region
      %s857 = ssub.s32 %s21, 2
    $region72: #{cgcn_forward.10} parent=5 // pred_fallthru
      _
  $region6: #{cgcn_forward.10} parent=0 // loop_footer
    %s25 = sadd.s32 1, %s21
  $region7: #{cgcn_forward.10} parent=0 // loop_footer_branch
    %20 = sbr.rel target = $region3
  $region8: #{cgcn_forward.10} parent=0 // loop_exit
    _

// kernel: cgcn_forward.13
$region0: #{cgcn_forward.13}
  #allocation0 [shape = 'u32[]', space=smem, size = 0x4, offset = 0x4, fixed_abs, tag = 'smem constant byte address 0x4 - core index']
  #allocation1 [shape = 'u32[144,128]{1,0:T(1,128)}', space=vmem, size = 0x12000, scoped, tag = 'internal scratch']
  %s0 = inlined_call_operand.vmem [shape: f32[16,128], index: 0, kind: input, shape index: {}]
  %s1 = inlined_call_operand.vmem [shape: f32[4,128], index: 1, kind: input, shape index: {}]
  %s2 = inlined_call_operand.vmem [shape: f32[1,4], index: 2, kind: input, shape index: {}]
  %s3 = inlined_call_operand.vmem [shape: f32[16,4], index: 3, kind: output, shape index: {0}]
  %s4 = inlined_call_operand.vmem [shape: f32[16,4], index: 4, kind: output, shape index: {1}]
  %5 = xla_tuple %s3, %s4
  %s6 = sld [smem:[#allocation0]]
  $region30: #{cgcn_forward.13} parent=0
    _
  %s8 = ssub.s32 1, %s6
  %s9 = scalar_select 0, %s8, %s6
  // Predicated region
  $region2: #{cgcn_forward.13} parent=0 // pred_check
    _
  $region3: #{cgcn_forward.13} parent=0 // pred_check_branch
    %11 = sbr.rel (0) target = $region5
  $region4: #{cgcn_forward.13} parent=0 // pred_region
    _
  $region5: #{cgcn_forward.13} parent=0 // pred_fallthru
    _
  // Predicated region
  $region6: #{cgcn_forward.13} parent=0 // pred_check
    _
  $region7: #{cgcn_forward.13} parent=0 // pred_check_branch
    %13 = sbr.rel (0) target = $region9
  $region8: #{cgcn_forward.13} parent=0 // pred_region
    _
  $region9: #{cgcn_forward.13} parent=0 // pred_fallthru
    _
  // Predicated region
  $region10: #{cgcn_forward.13} parent=0 // pred_check
    _
  $region11: #{cgcn_forward.13} parent=0 // pred_check_branch
    %15 = sbr.rel (0) target = $region13
  $region12: #{cgcn_forward.13} parent=0 // pred_region
    _
  $region13: #{cgcn_forward.13} parent=0 // pred_fallthru
    _
  %v16 = vld [vmem:[%s0] sm:$0xff]
  %v17 = vld [vmem:[%s0 + $0x8] sm:$0xff]
  %v18 = vld [vmem:[%s1] sm:$0xf]
  %v19 = vld [vmem:[%s2] sm:$0x1]
  %v21 = vlaneseq
  %v22 = vshrl.u32 %v21, 7
  %v23 = vsub.s32 0, %v22
  %v24 = vrot.slane %v19, %v23
  %26 = vmatprep.subr.mxu0 0.0
  %27 = vmatpush1.xpose.msra.mxu0 %v18
  %28 = vmatprep.subr.mxu0 0.0
  %29 = vmatpush1.xpose.msra.mxu0 0.0
  %30 = vmatprep.subr.mxu0 0.0
  %31 = vmatpush1.xpose.msra.mxu0 0.0
  %32 = vmatprep.subr.mxu0 0.0
  %33 = vmatpush1.xpose.msra.mxu0 0.0
  %34 = vmatprep.subr.mxu0 0.0
  %35 = vmatpush1.xpose.msra.mxu0 0.0
  %36 = vmatprep.subr.mxu0 0.0
  %37 = vmatpush1.xpose.msra.mxu0 0.0
  %38 = vmatprep.subr.mxu0 0.0
  %39 = vmatpush1.xpose.msra.mxu0 0.0
  %40 = vmatprep.subr.mxu0 0.0
  %41 = vmatpush1.xpose.msra.mxu0 0.0
  %42 = vmatprep.subr.mxu0 0.0
  %43 = vmatpush1.xpose.msra.mxu0 0.0
  %44 = vmatprep.subr.mxu0 0.0
  %45 = vmatpush1.xpose.msra.mxu0 0.0
  %46 = vmatprep.subr.mxu0 0.0
  %47 = vmatpush1.xpose.msra.mxu0 0.0
  %48 = vmatprep.subr.mxu0 0.0
  %49 = vmatpush1.xpose.msra.mxu0 0.0
  %50 = vmatprep.subr.mxu0 0.0
  %51 = vmatpush1.xpose.msra.mxu0 0.0
  %52 = vmatprep.subr.mxu0 0.0
  %53 = vmatpush1.xpose.msra.mxu0 0.0
  %54 = vmatprep.subr.mxu0 0.0
  %55 = vmatpush1.xpose.msra.mxu0 0.0
  %56 = vmatprep.subr.mxu0 0.0
  %57 = vmatpush1.xpose.msra.mxu0 0.0
  %58 = vmatprep.subr.mxu0 0.0
  %59 = vmatpush1.xpose.msra.mxu0 0.0
  %60 = vmatprep.subr.mxu0 0.0
  %61 = vmatpush1.xpose.msra.mxu0 0.0
  %62 = vmatprep.subr.mxu0 0.0
  %63 = vmatpush1.xpose.msra.mxu0 0.0
  %64 = vmatprep.subr.mxu0 0.0
  %65 = vmatpush1.xpose.msra.mxu0 0.0
  %66 = vmatprep.subr.mxu0 0.0
  %67 = vmatpush1.xpose.msra.mxu0 0.0
  %68 = vmatprep.subr.mxu0 0.0
  %69 = vmatpush1.xpose.msra.mxu0 0.0
  %70 = vmatprep.subr.mxu0 0.0
  %71 = vmatpush1.xpose.msra.mxu0 0.0
  %72 = vmatprep.subr.mxu0 0.0
  %73 = vmatpush1.xpose.msra.mxu0 0.0
  %74 = vmatprep.subr.mxu0 0.0
  %75 = vmatpush1.xpose.msra.mxu0 0.0
  %76 = vmatprep.subr.mxu0 0.0
  %77 = vmatpush1.xpose.msra.mxu0 0.0
  %78 = vmatprep.subr.mxu0 0.0
  %79 = vmatpush1.xpose.msra.mxu0 0.0
  %80 = vmatprep.subr.mxu0 0.0
  %81 = vmatpush1.xpose.msra.mxu0 0.0
  %82 = vmatprep.subr.mxu0 0.0
  %83 = vmatpush1.xpose.msra.mxu0 0.0
  %84 = vmatprep.subr.mxu0 0.0
  %85 = vmatpush1.xpose.msra.mxu0 0.0
  %86 = vmatprep.subr.mxu0 0.0
  %87 = vmatpush1.xpose.msra.mxu0 0.0
  %88 = vmatprep.subr.mxu0 0.0
  %89 = vmatpush1.xpose.msra.mxu0 0.0
  %90 = vmatprep.mubr.f32.mxu0 0.0
  %91 = vmatmul.mubr.f32.gmra.mrb[0].mxu0 %v16
  %v92 = vpop.f32.mrb[0].mxu0
  %v93 = vadd.f32 %v24, %v92
  %v94 = vpop.f32.mrb[0].mxu0
  %95 = vmatprep.mubr.f32.mxu0 0.0
  %96 = vmatmul.mubr.f32.gmra.mrb[0].mxu0 %v17
  %v97 = vpop.f32.mrb[0].mxu0
  %v98 = vadd.f32 %v24, %v97
  %v99 = vpop.f32.mrb[0].mxu0
  %100 = vdwg.mxu0
  %vm101 = vcmask 31744
  %v102 = vsel %vm101, %v93, -inf
  %103 = vmax.xlane.f32.xlu0 %v102
  %v104 = vpop.xlane.xlu0 %103
  %v105 = vsel %vm101, %v98, -inf
  %106 = vmax.xlane.f32.xlu0 %v105
  %v107 = vpop.xlane.xlu0 %106
  %v108 = vsub.f32 %v93, %v104
  %v109 = vsub.f32 %v98, %v107
  %v110 = vmul.f32 %v108, 1.442695
  %v111 = vpow.pop %v110
  %v112 = vmul.f32 %v109, 1.442695
  %v113 = vpow.pop %v112
  %v114 = vsel %vm101, %v111, 0.0
  %115 = vadd.xlane.f32.xlu0 %v114
  %v116 = vpop.xlane.xlu0 %115
  %v117 = vsel %vm101, %v113, 0.0
  %118 = vadd.xlane.f32.xlu0 %v117
  %v119 = vpop.xlane.xlu0 %118
  %v120 = vlog2.pop %v116
  %v121 = vmul.f32 %v120, 0.6931472
  %v122 = vlog2.pop %v119
  %v123 = vmul.f32 %v122, 0.6931472
  %v124 = vsub.f32 %v108, %v121
  %v125 = vsub.f32 %v109, %v123
  %126 = vst.msk [vmem:[%s3] sm:$0xff] %vm101, %v124
  %127 = vst.msk [vmem:[%s3 + $0x8] sm:$0xff] %vm101, %v125
  %128 = vst.msk [vmem:[%s4] sm:$0xff] %vm101, %v93
  %129 = vst.msk [vmem:[%s4 + $0x8] sm:$0xff] %vm101, %v98
  // Predicated region
  $region14: #{cgcn_forward.13} parent=0 // pred_check
    _
  $region15: #{cgcn_forward.13} parent=0 // pred_check_branch
    %131 = sbr.rel (0) target = $region17
  $region16: #{cgcn_forward.13} parent=0 // pred_region
    _
  $region17: #{cgcn_forward.13} parent=0 // pred_fallthru
    _
  // Predicated region
  $region18: #{cgcn_forward.13} parent=0 // pred_check
    _
  $region19: #{cgcn_forward.13} parent=0 // pred_check_branch
    %133 = sbr.rel (0) target = $region21
  $region20: #{cgcn_forward.13} parent=0 // pred_region
    _
  $region21: #{cgcn_forward.13} parent=0 // pred_fallthru
    _
  // Predicated region
  $region22: #{cgcn_forward.13} parent=0 // pred_check
    _
  $region23: #{cgcn_forward.13} parent=0 // pred_check_branch
    %135 = sbr.rel (0) target = $region25
  $region24: #{cgcn_forward.13} parent=0 // pred_region
    _
  $region25: #{cgcn_forward.13} parent=0 // pred_fallthru
    _
  // Predicated region
  $region26: #{cgcn_forward.13} parent=0 // pred_check
    _
  $region27: #{cgcn_forward.13} parent=0 // pred_check_branch
    %137 = sbr.rel (0) target = $region29
  $region28: #{cgcn_forward.13} parent=0 // pred_region
    _
  $region29: #{cgcn_forward.13} parent=0 // pred_fallthru
    _

</llo_original>
